<compile_context>
chip_gen: v7x
topology: tpu7x:2x2x1
jax: 0.10.0
libtpu: 0.0.40
codegen_flags: <defaults>
</compile_context>

<pallas_src>
import functools

import numpy as np
import jax
import jax.numpy as jnp
from jax import lax
from jax.experimental import pallas as pl
from jax.experimental.pallas import tpu as pltpu

LOG2 = float(np.log(2.0))


def _ssp(x):
    # shifted softplus: log(1 + exp(x)) - log(2), stable like torch (threshold 20)
    return jnp.where(x > 20.0, x, jnp.log1p(jnp.exp(jnp.minimum(x, 20.0)))) - LOG2


def _round_up(x, m):
    return ((x + m - 1) // m) * m


def interaction_kernel(
    node_ref,                                  # (Np, Fp) f32: node state (gather src + residual)
    edge_ref,                                  # (TE, Dp) mxu_dtype: edge-state tile
    send_ref,                                  # (1, TE, 1) int32: sender indices tile
    recv_ref,                                  # (1, 1, TE) int32: receiver indices tile
    w1e_ref, w1n_ref, b1_ref, w2_ref, b2_ref,  # packed message MLP (lane-dense, 2*Fp wide)
    w1s_ref, b1s_ref, w2s_ref, b2s_ref,        # state-transition MLP
    out_ref,                                   # (Np, Fp) f32
    msum_ref,                                  # (Np, Fp) f32 resident accumulator
    *,
    mxu_dtype,
):
    step = pl.program_id(0)
    TE = edge_ref.shape[0]
    Np, Fp = out_ref.shape

    @pl.when(step == 0)
    def _init_acc():
        msum_ref[...] = jnp.zeros_like(msum_ref)

    send = send_ref[0]                                                     # (TE, 1) int32
    recv = recv_ref[0]                                                     # (1, TE) int32

    # 1) gather sender rows on the MXU: (TE, Np) one-hot @ (Np, Fp) node block.
    #    Padded edges carry sender == Np -> all-zero row -> gathered zeros (harmless).
    col_ids = lax.broadcasted_iota(jnp.int32, (TE, Np), 1)
    oh_send = (col_ids == send).astype(mxu_dtype)                          # (TE, Np)
    nodes = jnp.dot(oh_send, node_ref[...].astype(mxu_dtype),
                    preferred_element_type=jnp.float32)                    # (TE, Fp) f32

    # 2) fused message MLP: layer-1 = edge@[W1e|0] + nodes@[0|W1n], layer-2 block-diag.
    pe = jnp.dot(edge_ref[...], w1e_ref[...],
                 preferred_element_type=jnp.float32)                       # (TE, 2Fp)
    pn = jnp.dot(nodes.astype(mxu_dtype), w1n_ref[...],
                 preferred_element_type=jnp.float32)                       # (TE, 2Fp)
    h = _ssp(pe + pn + b1_ref[...])                                        # f32
    y = jnp.dot(h.astype(mxu_dtype), w2_ref[...],
                preferred_element_type=jnp.float32) + b2_ref[...]          # (TE, 2Fp)
    messages = (y[:, :Fp] * y[:, Fp:]).astype(mxu_dtype)                   # gates * node-msgs

    # 3) scatter-add into the resident accumulator: (Np, TE) one-hot^T @ (TE, Fp).
    #    Padded edges carry receiver == Np -> all-zero column -> dropped.
    row_ids = lax.broadcasted_iota(jnp.int32, (Np, TE), 0)
    oh_recv = (row_ids == recv).astype(mxu_dtype)                          # (Np, TE)
    msum_ref[...] += jnp.dot(oh_recv, messages, preferred_element_type=jnp.float32)

    # 4) last tile: state-transition MLP + residual, single lane-dense output write.
    @pl.when(step == pl.num_programs(0) - 1)
    def _finalize():
        ms = msum_ref[...].astype(mxu_dtype)
        h2 = _ssp(jnp.dot(ms, w1s_ref[...],
                          preferred_element_type=jnp.float32) + b1s_ref[...])
        delta = jnp.dot(h2.astype(mxu_dtype), w2s_ref[...],
                        preferred_element_type=jnp.float32) + b2s_ref[...]
        out_ref[...] = (node_ref[...].astype(jnp.float32) + delta).astype(out_ref.dtype)


def _pack_params(params, F, Fp, D, Dp, mxu_dtype):
    """Zero-pad to lane-dense (Fp multiple of 128) and block-diagonal-pack the MLPs."""
    def pad2(a, rows, cols):
        a = jnp.asarray(a, jnp.float32)
        return jnp.pad(a, ((0, rows - a.shape[0]), (0, cols - a.shape[1])))

    w1e = pad2(params["w1e"], Dp, Fp)
    w1n = pad2(params["w1n"], Fp, Fp)
    w2e = pad2(params["w2e"], Fp, Fp)
    w2n = pad2(params["w2n"], Fp, Fp)
    b1e = pad2(params["b1e"], 1, Fp)
    b1n = pad2(params["b1n"], 1, Fp)
    b2e = pad2(params["b2e"], 1, Fp)
    b2n = pad2(params["b2n"], 1, Fp)

    zdf = jnp.zeros((Dp, Fp), jnp.float32)
    zff = jnp.zeros((Fp, Fp), jnp.float32)
    w1e_p = jnp.concatenate([w1e, zdf], axis=1)                  # (Dp, 2Fp) = [W1e | 0]
    w1n_p = jnp.concatenate([zff, w1n], axis=1)                  # (Fp, 2Fp) = [0 | W1n]
    b1 = jnp.concatenate([b1e, b1n], axis=1)                     # (1, 2Fp)
    w2 = jnp.concatenate(
        [jnp.concatenate([w2e, zff], axis=1),
         jnp.concatenate([zff, w2n], axis=1)], axis=0)           # (2Fp, 2Fp) block-diag
    b2 = jnp.concatenate([b2e, b2n], axis=1)                     # (1, 2Fp)

    w1s = pad2(params["w1s"], Fp, Fp)
    b1s = pad2(params["b1s"], 1, Fp)
    w2s = pad2(params["w2s"], Fp, Fp)
    b2s = pad2(params["b2s"], 1, Fp)

    return (
        w1e_p.astype(mxu_dtype), w1n_p.astype(mxu_dtype), b1,
        w2.astype(mxu_dtype), b2,
        w1s.astype(mxu_dtype), b1s, w2s.astype(mxu_dtype), b2s,
    )


def _vmem_ceiling_bytes():
    """Generation-aware VMEM clamp (~75% of physical); 32 MiB fallback (fits v7x)."""
    default = 32 << 20
    try:
        info = pltpu.get_tpu_info()
        cap = getattr(info, "vmem_capacity_bytes", None)
        if cap:
            return max(default, min(int(cap) * 3 // 4, 128 << 20))
    except Exception:
        pass
    return default


def _vmem_limit_bytes(Np, Fp, Dp, TE, mxu_bytes):
    need = (
        2 * (TE * Dp * mxu_bytes + 2 * TE * 4)                     # streamed edge/idx tiles (x2 buf)
        + 4 * Np * Fp * 4                                          # resident node + output blocks
        + 2 * ((Dp + Fp) * 2 * Fp * mxu_bytes
               + 4 * Fp * Fp * mxu_bytes
               + 2 * Fp * Fp * mxu_bytes
               + 6 * Fp * 4)                                       # weights + biases
        + Np * Fp * 4                                              # message_sum accumulator
        + 6 * TE * 2 * Fp * 4 + 2 * TE * Np * 4                    # activation / one-hot temporaries
    )
    return int(min(max(3 * need, 4 << 20), _vmem_ceiling_bytes()))


def interaction_forward(node_state, edges, edge_state, params, *,
                        edge_tile=128, mxu_dtype=jnp.bfloat16):
    """Pallas wrapper.  node_state (N,F) f32, edges (E,2) int, edge_state (E,D) f32."""
    node_state = jnp.asarray(node_state, jnp.float32)
    edge_state = jnp.asarray(edge_state, jnp.float32)
    N, F = node_state.shape
    E, D = edge_state.shape

    Fp = _round_up(F, 128)          # lane-dense feature dim (output / activations / weights)
    Dp = _round_up(D, 8)            # sublane-aligned edge-feature dim
    Np = _round_up(N, 8)            # sublane-aligned node dim
    TE = _round_up(max(int(edge_tile), 8), 8)
    num_tiles = int(pl.cdiv(E, TE))
    E_pad = num_tiles * TE
    pad_e = E_pad - E
    mxu_bytes = jnp.dtype(mxu_dtype).itemsize

    # Pad: senders/receivers of padded edges point at row Np (out of iota range) so their
    # one-hot row/column is all zero -> gathered zeros / dropped messages.
    senders = jnp.pad(edges[:, 0].astype(jnp.int32), (0, pad_e), constant_values=Np)
    receivers = jnp.pad(edges[:, 1].astype(jnp.int32), (0, pad_e), constant_values=Np)
    edge_p = jnp.pad(edge_state, ((0, pad_e), (0, Dp - D))).astype(mxu_dtype)
    node_p = jnp.pad(node_state, ((0, Np - N), (0, Fp - F)))      # stays f32 (residual)

    send_tiles = senders.reshape(num_tiles, TE, 1)
    recv_tiles = receivers.reshape(num_tiles, 1, TE)
    weight_args = _pack_params(params, F, Fp, D, Dp, mxu_dtype)

    const = lambda i: (0, 0)
    grid_spec = pltpu.PrefetchScalarGridSpec(
        num_scalar_prefetch=0,
        grid=(num_tiles,),
        in_specs=[
            pl.BlockSpec((Np, Fp), const),                         # node_state (resident)
            pl.BlockSpec((TE, Dp), lambda i: (i, 0)),              # edge_state tile
            pl.BlockSpec((1, TE, 1), lambda i: (i, 0, 0)),         # sender tile
            pl.BlockSpec((1, 1, TE), lambda i: (i, 0, 0)),         # receiver tile
            pl.BlockSpec((Dp, 2 * Fp), const),                     # W1 edge part
            pl.BlockSpec((Fp, 2 * Fp), const),                     # W1 node part
            pl.BlockSpec((1, 2 * Fp), const),                      # b1
            pl.BlockSpec((2 * Fp, 2 * Fp), const),                 # W2 block-diag
            pl.BlockSpec((1, 2 * Fp), const),                      # b2
            pl.BlockSpec((Fp, Fp), const),                         # W1s
            pl.BlockSpec((1, Fp), const),                          # b1s
            pl.BlockSpec((Fp, Fp), const),                         # W2s
            pl.BlockSpec((1, Fp), const),                          # b2s
        ],
        out_specs=pl.BlockSpec((Np, Fp), const),
        scratch_shapes=[pltpu.VMEM((Np, Fp), jnp.float32)],        # message_sum accumulator
    )

    flops = int(
        2 * E_pad * (Np * Fp                 # gather one-hot matmul
                     + Dp * 2 * Fp           # layer-1 edge branch
                     + Fp * 2 * Fp           # layer-1 node branch
                     + (2 * Fp) * (2 * Fp)   # layer-2 block-diag
                     + Np * Fp)              # scatter one-hot matmul
        + 2 * 2 * Np * Fp * Fp               # state-transition MLP
    )
    transcendentals = int(E_pad * 2 * Fp + Np * Fp)
    bytes_accessed = int(
        2 * Np * Fp * 4
        + E_pad * (Dp * mxu_bytes + 8)
        + ((Dp + Fp) * 2 * Fp + 6 * Fp * Fp) * mxu_bytes + 6 * Fp * 4
    )

    kernel = functools.partial(interaction_kernel, mxu_dtype=mxu_dtype)
    out_p = pl.pallas_call(
        kernel,
        out_shape=jax.ShapeDtypeStruct((Np, Fp), jnp.float32),
        grid_spec=grid_spec,
        compiler_params=pltpu.CompilerParams(
            dimension_semantics=("arbitrary",),                    # accumulator across edge tiles
            vmem_limit_bytes=_vmem_limit_bytes(Np, Fp, Dp, TE, mxu_bytes),
        ),
        cost_estimate=pl.CostEstimate(
            flops=flops, transcendentals=transcendentals, bytes_accessed=bytes_accessed),
    )(node_p, edge_p, send_tiles, recv_tiles, *weight_args)

    return out_p[:N, :F]


def init_linear(key, in_dim, out_dim):
    """Deterministic init mimicking torch.nn.Linear default (uniform +-1/sqrt(fan_in)).
    Weight returned pre-transposed as (in_dim, out_dim)."""
    kw, kb = jax.random.split(key)
    bound = 1.0 / np.sqrt(in_dim)
    w = jax.random.uniform(kw, (in_dim, out_dim), jnp.float32, -bound, bound)
    b = jax.random.uniform(kb, (1, out_dim), jnp.float32, -bound, bound)
    return w, b


def init_params(key, node_size, edge_size):
    keys = jax.random.split(key, 6)
    w1e, b1e = init_linear(keys[0], edge_size, node_size)
    w2e, b2e = init_linear(keys[1], node_size, node_size)
    w1n, b1n = init_linear(keys[2], node_size, node_size)
    w2n, b2n = init_linear(keys[3], node_size, node_size)
    w1s, b1s = init_linear(keys[4], node_size, node_size)
    w2s, b2s = init_linear(keys[5], node_size, node_size)
    return dict(w1e=w1e, b1e=b1e, w2e=w2e, b2e=b2e,
                w1n=w1n, b1n=b1n, w2n=w2n, b2n=b2n,
                w1s=w1s, b1s=b1s, w2s=w2s, b2s=b2s)


def interaction_reference(node_state, edges, edge_state, params):
    """Pure-JAX reference matching the PyTorch forward."""
    nodes = node_state[edges[:, 0]]
    gates = _ssp(edge_state @ params["w1e"] + params["b1e"]) @ params["w2e"] + params["b2e"]
    nmsg = _ssp(nodes @ params["w1n"] + params["b1n"]) @ params["w2n"] + params["b2n"]
    messages = nmsg * gates
    message_sum = jnp.zeros_like(node_state).at[edges[:, 1]].add(messages)
    delta = _ssp(message_sum @ params["w1s"] + params["b1s"]) @ params["w2s"] + params["b2s"]
    return node_state + delta


if __name__ == "__main__":
    num_nodes = 8
    num_edges = 20          # deliberately NOT a multiple of edge_tile -> exercises padding
    node_size = 32
    edge_size = 16

    key = jax.random.PRNGKey(0)
    k_node, k_edge, k_snd, k_rcv, k_par = jax.random.split(key, 5)

    node_state = jax.random.normal(k_node, (num_nodes, node_size), jnp.float32)
    edge_state = jax.random.normal(k_edge, (num_edges, edge_size), jnp.float32)
    senders = jax.random.randint(k_snd, (num_edges,), 0, num_nodes, jnp.int32)
    receivers = jax.random.randint(k_rcv, (num_edges,), 0, num_nodes, jnp.int32)
    edges = jnp.stack([senders, receivers], axis=1)   # (E, 2)

    params = init_params(k_par, node_size, edge_size)
    ref = interaction_reference(node_state, edges, edge_state, params)

    # Exactness check with f32 MXU operands (tight tolerance).
    out_f32 = interaction_forward(node_state, edges, edge_state, params,
                                  edge_tile=128, mxu_dtype=jnp.float32)
    out_f32 = jax.block_until_ready(out_f32)
    np.testing.assert_allclose(np.asarray(out_f32), np.asarray(ref), rtol=1e-4, atol=1e-5)

    # Default fast path: bf16 MXU operands, f32 accumulation / elementwise (loose tolerance).
    out_bf16 = interaction_forward(node_state, edges, edge_state, params,
                                   edge_tile=128, mxu_dtype=jnp.bfloat16)
    out_bf16 = jax.block_until_ready(out_bf16)
    np.testing.assert_allclose(np.asarray(out_bf16), np.asarray(ref), rtol=5e-2, atol=8e-2)

    print("KERNEL_OK")
</pallas_src>

<mosaic_0001>
module attributes {stable_mosaic.version = 11 : i64} {
  func.func @interaction_kernel(%arg0: i32, %arg1: memref<8x128xf32, #tpu.memory_space<vmem>>, %arg2: memref<128x16xf32, #tpu.memory_space<vmem>>, %arg3: memref<1x128x1xi32, #tpu.memory_space<vmem>>, %arg4: memref<1x1x128xi32, #tpu.memory_space<vmem>>, %arg5: memref<16x256xf32, #tpu.memory_space<vmem>>, %arg6: memref<128x256xf32, #tpu.memory_space<vmem>>, %arg7: memref<1x256xf32, #tpu.memory_space<vmem>>, %arg8: memref<256x256xf32, #tpu.memory_space<vmem>>, %arg9: memref<1x256xf32, #tpu.memory_space<vmem>>, %arg10: memref<128x128xf32, #tpu.memory_space<vmem>>, %arg11: memref<1x128xf32, #tpu.memory_space<vmem>>, %arg12: memref<128x128xf32, #tpu.memory_space<vmem>>, %arg13: memref<1x128xf32, #tpu.memory_space<vmem>>, %arg14: memref<8x128xf32, #tpu.memory_space<vmem>>, %arg15: memref<8x128xf32, #tpu.memory_space<vmem>>) attributes {dimension_semantics = [#tpu.dimension_semantics<arbitrary>], iteration_bounds = array<i64: 1>, scalar_prefetch = 0 : i64, scratch_operands = 1 : i64, tpu.core_type = #tpu.core_type<tc>, window_params = [{pipeline_mode = #tpu.pipeline_mode<synchronous>, transform_indices = @transform_0, window_bounds = array<i64: 8, 128>}, {transform_indices = @transform_1, window_bounds = array<i64: 128, 16>}, {transform_indices = @transform_2, window_bounds = array<i64: 1, 128, 1>}, {transform_indices = @transform_3, window_bounds = array<i64: 1, 1, 128>}, {pipeline_mode = #tpu.pipeline_mode<synchronous>, transform_indices = @transform_4, window_bounds = array<i64: 16, 256>}, {pipeline_mode = #tpu.pipeline_mode<synchronous>, transform_indices = @transform_5, window_bounds = array<i64: 128, 256>}, {pipeline_mode = #tpu.pipeline_mode<synchronous>, transform_indices = @transform_6, window_bounds = array<i64: 1, 256>}, {pipeline_mode = #tpu.pipeline_mode<synchronous>, transform_indices = @transform_7, window_bounds = array<i64: 256, 256>}, {pipeline_mode = #tpu.pipeline_mode<synchronous>, transform_indices = @transform_8, window_bounds = array<i64: 1, 256>}, {pipeline_mode = #tpu.pipeline_mode<synchronous>, transform_indices = @transform_9, window_bounds = array<i64: 128, 128>}, {pipeline_mode = #tpu.pipeline_mode<synchronous>, transform_indices = @transform_10, window_bounds = array<i64: 1, 128>}, {pipeline_mode = #tpu.pipeline_mode<synchronous>, transform_indices = @transform_11, window_bounds = array<i64: 128, 128>}, {pipeline_mode = #tpu.pipeline_mode<synchronous>, transform_indices = @transform_12, window_bounds = array<i64: 1, 128>}, {pipeline_mode = #tpu.pipeline_mode<synchronous>, transform_indices = @transform_13, window_bounds = array<i64: 8, 128>}]} {
    %c0_i32 = arith.constant 0 : i32
    %0 = arith.cmpi eq, %arg0, %c0_i32 : i32
    %1 = arith.extui %0 : i1 to i32
    %c0_i32_0 = arith.constant 0 : i32
    %2 = arith.cmpi ne, %1, %c0_i32_0 : i32
    scf.if %2 {
      %cst_33 = arith.constant 0.000000e+00 : f32
      %52 = vector.broadcast %cst_33 : f32 to vector<8x128xf32>
      %c0_34 = arith.constant 0 : index
      %c0_35 = arith.constant 0 : index
      %53 = vector.load %arg15[%c0_34, %c0_35] : memref<8x128xf32, #tpu.memory_space<vmem>>, vector<8x128xf32>
      tpu.vector_store %arg15[%c0_34, %c0_35], %52 {strides = array<i32>} : memref<8x128xf32, #tpu.memory_space<vmem>>, vector<8x128xf32>,
    } else {
    }
    %c0 = arith.constant 0 : index
    %c0_1 = arith.constant 0 : index
    %c0_2 = arith.constant 0 : index
    %3 = vector.load %arg3[%c0, %c0_1, %c0_2] : memref<1x128x1xi32, #tpu.memory_space<vmem>>, vector<1x128x1xi32>
    %4 = vector.shape_cast %3 : vector<1x128x1xi32> to vector<128x1xi32>
    %c0_3 = arith.constant 0 : index
    %c0_4 = arith.constant 0 : index
    %c0_5 = arith.constant 0 : index
    %5 = vector.load %arg4[%c0_3, %c0_4, %c0_5] : memref<1x1x128xi32, #tpu.memory_space<vmem>>, vector<1x1x128xi32>
    %6 = vector.shape_cast %5 : vector<1x1x128xi32> to vector<1x128xi32>
    %7 = tpu.iota {dimensions = array<i32: 1>} : vector<128x8xi32>
    %8 = vector.broadcast %4 : vector<128x1xi32> to vector<128x8xi32>
    %9 = arith.cmpi eq, %7, %8 : vector<128x8xi32>
    %10 = arith.extui %9 : vector<128x8xi1> to vector<128x8xi32>
    %11 = arith.sitofp %10 : vector<128x8xi32> to vector<128x8xf32>
    %c0_6 = arith.constant 0 : index
    %c0_7 = arith.constant 0 : index
    %12 = vector.load %arg1[%c0_6, %c0_7] : memref<8x128xf32, #tpu.memory_space<vmem>>, vector<8x128xf32>
    %cst = arith.constant dense<0.000000e+00> : vector<128x128xf32>
    %13 = tpu.matmul %11, %12, %cst {dimension_numbers = #tpu.dot_dimension_numbers<[1], [0], [0], [1], [0, 0, 1, 1], [], []>} : vector<128x8xf32>, vector<8x128xf32>, vector<128x128xf32> -> vector<128x128xf32>
    %c0_8 = arith.constant 0 : index
    %c0_9 = arith.constant 0 : index
    %14 = vector.load %arg2[%c0_8, %c0_9] : memref<128x16xf32, #tpu.memory_space<vmem>>, vector<128x16xf32>
    %c0_10 = arith.constant 0 : index
    %c0_11 = arith.constant 0 : index
    %15 = vector.load %arg5[%c0_10, %c0_11] : memref<16x256xf32, #tpu.memory_space<vmem>>, vector<16x256xf32>
    %cst_12 = arith.constant dense<0.000000e+00> : vector<128x256xf32>
    %16 = tpu.matmul %14, %15, %cst_12 {dimension_numbers = #tpu.dot_dimension_numbers<[1], [0], [0], [1], [0, 0, 1, 1], [], []>} : vector<128x16xf32>, vector<16x256xf32>, vector<128x256xf32> -> vector<128x256xf32>
    %c0_13 = arith.constant 0 : index
    %c0_14 = arith.constant 0 : index
    %17 = vector.load %arg6[%c0_13, %c0_14] : memref<128x256xf32, #tpu.memory_space<vmem>>, vector<128x256xf32>
    %cst_15 = arith.constant dense<0.000000e+00> : vector<128x256xf32>
    %18 = tpu.matmul %13, %17, %cst_15 {dimension_numbers = #tpu.dot_dimension_numbers<[1], [0], [0], [1], [0, 0, 1, 1], [], []>} : vector<128x128xf32>, vector<128x256xf32>, vector<128x256xf32> -> vector<128x256xf32>
    %19 = arith.addf %16, %18 : vector<128x256xf32>
    %c0_16 = arith.constant 0 : index
    %c0_17 = arith.constant 0 : index
    %20 = vector.load %arg7[%c0_16, %c0_17] : memref<1x256xf32, #tpu.memory_space<vmem>>, vector<1x256xf32>
    %21 = vector.broadcast %20 : vector<1x256xf32> to vector<128x256xf32>
    %22 = arith.addf %19, %21 : vector<128x256xf32>
    %cst_18 = arith.constant 2.000000e+01 : f32
    %23 = vector.broadcast %cst_18 : f32 to vector<128x256xf32>
    %24 = arith.cmpf ogt, %22, %23 : vector<128x256xf32>
    %cst_19 = arith.constant 2.000000e+01 : f32
    %25 = vector.broadcast %cst_19 : f32 to vector<128x256xf32>
    %26 = arith.minimumf %22, %25 : vector<128x256xf32>
    %27 = math.exp %26 : vector<128x256xf32>
    %28 = math.log1p %27 : vector<128x256xf32>
    %29 = arith.select %24, %22, %28 : vector<128x256xi1>, vector<128x256xf32>
    %cst_20 = arith.constant 0.693147182 : f32
    %30 = vector.broadcast %cst_20 : f32 to vector<128x256xf32>
    %31 = arith.subf %29, %30 : vector<128x256xf32>
    %c0_21 = arith.constant 0 : index
    %c0_22 = arith.constant 0 : index
    %32 = vector.load %arg8[%c0_21, %c0_22] : memref<256x256xf32, #tpu.memory_space<vmem>>, vector<256x256xf32>
    %cst_23 = arith.constant dense<0.000000e+00> : vector<128x256xf32>
    %33 = tpu.matmul %31, %32, %cst_23 {dimension_numbers = #tpu.dot_dimension_numbers<[1], [0], [0], [1], [0, 0, 1, 1], [], []>} : vector<128x256xf32>, vector<256x256xf32>, vector<128x256xf32> -> vector<128x256xf32>
    %c0_24 = arith.constant 0 : index
    %c0_25 = arith.constant 0 : index
    %34 = vector.load %arg9[%c0_24, %c0_25] : memref<1x256xf32, #tpu.memory_space<vmem>>, vector<1x256xf32>
    %35 = vector.broadcast %34 : vector<1x256xf32> to vector<128x256xf32>
    %36 = arith.addf %33, %35 : vector<128x256xf32>
    %37 = vector.extract_strided_slice %36 {offsets = [0, 0], sizes = [128, 128], strides = [1, 1]} : vector<128x256xf32> to vector<128x128xf32>
    %38 = vector.extract_strided_slice %36 {offsets = [0, 128], sizes = [128, 128], strides = [1, 1]} : vector<128x256xf32> to vector<128x128xf32>
    %39 = arith.mulf %37, %38 : vector<128x128xf32>
    %40 = tpu.iota {dimensions = array<i32: 0>} : vector<8x128xi32>
    %41 = vector.broadcast %6 : vector<1x128xi32> to vector<8x128xi32>
    %42 = arith.cmpi eq, %40, %41 : vector<8x128xi32>
    %43 = arith.extui %42 : vector<8x128xi1> to vector<8x128xi32>
    %44 = arith.sitofp %43 : vector<8x128xi32> to vector<8x128xf32>
    %c0_26 = arith.constant 0 : index
    %c0_27 = arith.constant 0 : index
    %45 = vector.load %arg15[%c0_26, %c0_27] : memref<8x128xf32, #tpu.memory_space<vmem>>, vector<8x128xf32>
    %cst_28 = arith.constant dense<0.000000e+00> : vector<8x128xf32>
    %46 = tpu.matmul %44, %39, %cst_28 {dimension_numbers = #tpu.dot_dimension_numbers<[1], [0], [0], [1], [0, 0, 1, 1], [], []>} : vector<8x128xf32>, vector<128x128xf32>, vector<8x128xf32> -> vector<8x128xf32>
    %47 = arith.addf %45, %46 : vector<8x128xf32>
    %c0_29 = arith.constant 0 : index
    %c0_30 = arith.constant 0 : index
    %48 = vector.load %arg15[%c0_29, %c0_30] : memref<8x128xf32, #tpu.memory_space<vmem>>, vector<8x128xf32>
    tpu.vector_store %arg15[%c0_29, %c0_30], %47 {strides = array<i32>} : memref<8x128xf32, #tpu.memory_space<vmem>>, vector<8x128xf32>,
    %c0_i32_31 = arith.constant 0 : i32
    %49 = arith.cmpi eq, %arg0, %c0_i32_31 : i32
    %50 = arith.extui %49 : i1 to i32
    %c0_i32_32 = arith.constant 0 : i32
    %51 = arith.cmpi ne, %50, %c0_i32_32 : i32
    scf.if %51 {
      %c0_33 = arith.constant 0 : index
      %c0_34 = arith.constant 0 : index
      %52 = vector.load %arg15[%c0_33, %c0_34] : memref<8x128xf32, #tpu.memory_space<vmem>>, vector<8x128xf32>
      %c0_35 = arith.constant 0 : index
      %c0_36 = arith.constant 0 : index
      %53 = vector.load %arg10[%c0_35, %c0_36] : memref<128x128xf32, #tpu.memory_space<vmem>>, vector<128x128xf32>
      %cst_37 = arith.constant dense<0.000000e+00> : vector<8x128xf32>
      %54 = tpu.matmul %52, %53, %cst_37 {dimension_numbers = #tpu.dot_dimension_numbers<[1], [0], [0], [1], [0, 0, 1, 1], [], []>} : vector<8x128xf32>, vector<128x128xf32>, vector<8x128xf32> -> vector<8x128xf32>
      %c0_38 = arith.constant 0 : index
      %c0_39 = arith.constant 0 : index
      %55 = vector.load %arg11[%c0_38, %c0_39] : memref<1x128xf32, #tpu.memory_space<vmem>>, vector<1x128xf32>
      %56 = vector.broadcast %55 : vector<1x128xf32> to vector<8x128xf32>
      %57 = arith.addf %54, %56 : vector<8x128xf32>
      %cst_40 = arith.constant 2.000000e+01 : f32
      %58 = vector.broadcast %cst_40 : f32 to vector<8x128xf32>
      %59 = arith.cmpf ogt, %57, %58 : vector<8x128xf32>
      %cst_41 = arith.constant 2.000000e+01 : f32
      %60 = vector.broadcast %cst_41 : f32 to vector<8x128xf32>
      %61 = arith.minimumf %57, %60 : vector<8x128xf32>
      %62 = math.exp %61 : vector<8x128xf32>
      %63 = math.log1p %62 : vector<8x128xf32>
      %64 = arith.select %59, %57, %63 : vector<8x128xi1>, vector<8x128xf32>
      %cst_42 = arith.constant 0.693147182 : f32
      %65 = vector.broadcast %cst_42 : f32 to vector<8x128xf32>
      %66 = arith.subf %64, %65 : vector<8x128xf32>
      %c0_43 = arith.constant 0 : index
      %c0_44 = arith.constant 0 : index
      %67 = vector.load %arg12[%c0_43, %c0_44] : memref<128x128xf32, #tpu.memory_space<vmem>>, vector<128x128xf32>
      %cst_45 = arith.constant dense<0.000000e+00> : vector<8x128xf32>
      %68 = tpu.matmul %66, %67, %cst_45 {dimension_numbers = #tpu.dot_dimension_numbers<[1], [0], [0], [1], [0, 0, 1, 1], [], []>} : vector<8x128xf32>, vector<128x128xf32>, vector<8x128xf32> -> vector<8x128xf32>
      %c0_46 = arith.constant 0 : index
      %c0_47 = arith.constant 0 : index
      %69 = vector.load %arg13[%c0_46, %c0_47] : memref<1x128xf32, #tpu.memory_space<vmem>>, vector<1x128xf32>
      %70 = vector.broadcast %69 : vector<1x128xf32> to vector<8x128xf32>
      %71 = arith.addf %68, %70 : vector<8x128xf32>
      %c0_48 = arith.constant 0 : index
      %c0_49 = arith.constant 0 : index
      %72 = vector.load %arg1[%c0_48, %c0_49] : memref<8x128xf32, #tpu.memory_space<vmem>>, vector<8x128xf32>
      %73 = arith.addf %72, %71 : vector<8x128xf32>
      %c0_50 = arith.constant 0 : index
      %c0_51 = arith.constant 0 : index
      %74 = vector.load %arg14[%c0_50, %c0_51] : memref<8x128xf32, #tpu.memory_space<vmem>>, vector<8x128xf32>
      tpu.vector_store %arg14[%c0_50, %c0_51], %73 {strides = array<i32>} : memref<8x128xf32, #tpu.memory_space<vmem>>, vector<8x128xf32>,
    } else {
    }
    return
  }
  func.func @transform_0(%arg0: i32) -> (i32, i32) {
    %c0_i32 = arith.constant 0 : i32
    %c0_i32_0 = arith.constant 0 : i32
    %c0_i32_1 = arith.constant 0 : i32
    return %c0_i32, %c0_i32_0 : i32, i32
  }
  func.func @transform_1(%arg0: i32) -> (i32, i32) {
    %c0_i32 = arith.constant 0 : i32
    %c0_i32_0 = arith.constant 0 : i32
    return %arg0, %c0_i32 : i32, i32
  }
  func.func @transform_2(%arg0: i32) -> (i32, i32, i32) {
    %c0_i32 = arith.constant 0 : i32
    %c0_i32_0 = arith.constant 0 : i32
    %c0_i32_1 = arith.constant 0 : i32
    return %arg0, %c0_i32, %c0_i32_0 : i32, i32, i32
  }
  func.func @transform_3(%arg0: i32) -> (i32, i32, i32) {
    %c0_i32 = arith.constant 0 : i32
    %c0_i32_0 = arith.constant 0 : i32
    %c0_i32_1 = arith.constant 0 : i32
    return %arg0, %c0_i32, %c0_i32_0 : i32, i32, i32
  }
  func.func @transform_4(%arg0: i32) -> (i32, i32) {
    %c0_i32 = arith.constant 0 : i32
    %c0_i32_0 = arith.constant 0 : i32
    %c0_i32_1 = arith.constant 0 : i32
    return %c0_i32, %c0_i32_0 : i32, i32
  }
  func.func @transform_5(%arg0: i32) -> (i32, i32) {
    %c0_i32 = arith.constant 0 : i32
    %c0_i32_0 = arith.constant 0 : i32
    %c0_i32_1 = arith.constant 0 : i32
    return %c0_i32, %c0_i32_0 : i32, i32
  }
  func.func @transform_6(%arg0: i32) -> (i32, i32) {
    %c0_i32 = arith.constant 0 : i32
    %c0_i32_0 = arith.constant 0 : i32
    %c0_i32_1 = arith.constant 0 : i32
    return %c0_i32, %c0_i32_0 : i32, i32
  }
  func.func @transform_7(%arg0: i32) -> (i32, i32) {
    %c0_i32 = arith.constant 0 : i32
    %c0_i32_0 = arith.constant 0 : i32
    %c0_i32_1 = arith.constant 0 : i32
    return %c0_i32, %c0_i32_0 : i32, i32
  }
  func.func @transform_8(%arg0: i32) -> (i32, i32) {
    %c0_i32 = arith.constant 0 : i32
    %c0_i32_0 = arith.constant 0 : i32
    %c0_i32_1 = arith.constant 0 : i32
    return %c0_i32, %c0_i32_0 : i32, i32
  }
  func.func @transform_9(%arg0: i32) -> (i32, i32) {
    %c0_i32 = arith.constant 0 : i32
    %c0_i32_0 = arith.constant 0 : i32
    %c0_i32_1 = arith.constant 0 : i32
    return %c0_i32, %c0_i32_0 : i32, i32
  }
  func.func @transform_10(%arg0: i32) -> (i32, i32) {
    %c0_i32 = arith.constant 0 : i32
    %c0_i32_0 = arith.constant 0 : i32
    %c0_i32_1 = arith.constant 0 : i32
    return %c0_i32, %c0_i32_0 : i32, i32
  }
  func.func @transform_11(%arg0: i32) -> (i32, i32) {
    %c0_i32 = arith.constant 0 : i32
    %c0_i32_0 = arith.constant 0 : i32
    %c0_i32_1 = arith.constant 0 : i32
    return %c0_i32, %c0_i32_0 : i32, i32
  }
  func.func @transform_12(%arg0: i32) -> (i32, i32) {
    %c0_i32 = arith.constant 0 : i32
    %c0_i32_0 = arith.constant 0 : i32
    %c0_i32_1 = arith.constant 0 : i32
    return %c0_i32, %c0_i32_0 : i32, i32
  }
  func.func @transform_13(%arg0: i32) -> (i32, i32) {
    %c0_i32 = arith.constant 0 : i32
    %c0_i32_0 = arith.constant 0 : i32
    %c0_i32_1 = arith.constant 0 : i32
    return %c0_i32, %c0_i32_0 : i32, i32
  }
}

</mosaic_0001>

<llo_original>
// kernel: tpu_custom_call.1
$region0: #{tpu_custom_call.1}
  #allocation0 [shape = 'u32[]', space=smem, size = 0x4, offset = 0x4, fixed_abs, tag = 'smem constant byte address 0x4 - core index']
  #allocation1 [shape = 'u32[144,128]{1,0:T(1,128)}', space=vmem, size = 0x12000, scoped, tag = 'internal scratch']
  #allocation2 [shape = 'f32[8,128]{1,0:T(8,128)}', space=vmem, size = 0x1000, scoped, tag = 'scratch operand']
  %s0 = inlined_call_operand.hbm [shape: f32[8,128], index: 0, kind: input, shape index: {}]
  %s1 = inlined_call_operand.vmem [shape: f32[128,16], index: 1, kind: input, shape index: {}]
  %s2 = inlined_call_operand.vmem [shape: s32[1,128,1], index: 2, kind: input, shape index: {}]
  %s3 = inlined_call_operand.vmem [shape: s32[1,1,128], index: 3, kind: input, shape index: {}]
  %s4 = inlined_call_operand.vmem [shape: f32[16,256], index: 4, kind: input, shape index: {}]
  %s5 = inlined_call_operand.vmem [shape: f32[128,256], index: 5, kind: input, shape index: {}]
  %s6 = inlined_call_operand.vmem [shape: f32[1,256], index: 6, kind: input, shape index: {}]
  %s7 = inlined_call_operand.hbm [shape: f32[256,256], index: 7, kind: input, shape index: {}]
  %s8 = inlined_call_operand.vmem [shape: f32[1,256], index: 8, kind: input, shape index: {}]
  %s9 = inlined_call_operand.hbm [shape: f32[128,128], index: 9, kind: input, shape index: {}]
  %s10 = inlined_call_operand.vmem [shape: f32[1,128], index: 10, kind: input, shape index: {}]
  %s11 = inlined_call_operand.hbm [shape: f32[128,128], index: 11, kind: input, shape index: {}]
  %s12 = inlined_call_operand.vmem [shape: f32[1,128], index: 12, kind: input, shape index: {}]
  %s13 = inlined_call_operand.hbm [shape: f32[8,128], index: 13, kind: output, shape index: {}]
  %s14 = sld [smem:[#allocation0]]
  $region86: #{tpu_custom_call.1} parent=0
    _
  %s16 = ssub.s32 1, %s14
  %s17 = scalar_select 0, %s16, %s14
  $region1: #{tpu_custom_call.1} parent=0
    #allocation3 [shape = 'u8[4096]{0}', space=vmem, size = 0x1000, scoped, tag = 'input window, operand 0, single buffered']
    #allocation4 [shape = 's32[1]{0}', space=sflag, size = 0x4, scoped, tag = 'scoped memory for tpu_custom_call.1']
    #allocation5 [shape = 's32[1]{0}', space=sflag, size = 0x4, scoped, tag = 'scoped memory for tpu_custom_call.1']
    #allocation6 [shape = 'u8[262144]{0}', space=vmem, size = 0x40000, scoped, tag = 'input window, operand 7, single buffered']
    #allocation7 [shape = 's32[1]{0}', space=sflag, size = 0x4, scoped, tag = 'scoped memory for tpu_custom_call.1']
    #allocation8 [shape = 'u8[65536]{0}', space=vmem, size = 0x10000, scoped, tag = 'input window, operand 9, single buffered']
    #allocation9 [shape = 'u8[65536]{0}', space=vmem, size = 0x10000, scoped, tag = 'input window, operand 11, single buffered']
    #allocation10 [shape = 's32[1]{0}', space=sflag, size = 0x4, scoped, tag = 'scoped memory for tpu_custom_call.1']
    #allocation11 [shape = 'u8[4096]{0}', space=vmem, size = 0x1000, scoped, tag = 'output window, operand 0, single buffered']
    %18 = vsyncpa [#allocation4], 0
    %19 = vsyncpa [#allocation7], 0
    %20 = vsyncpa [#allocation10], 0
    %21 = vsyncpa [#allocation5], 0
    // Predicated region
    $region2: #{tpu_custom_call.1} parent=1 // pred_check
      _
    $region3: #{tpu_custom_call.1} parent=1 // pred_check_branch
      %23 = sbr.rel (0) target = $region5
    $region4: #{tpu_custom_call.1} parent=1 // pred_region
      %s25 = ssub.s32 128, 128
      %26 = vsyncadd [#allocation4], %s25
      %s28 = sshll.u32 [#allocation3], 4
      %s29 = int_to_ptr.vmem [resolvable:$true] %s28
      %31 = dma.hbm_to_vmem [thread:$0]  %s0, 128, %s29, [#allocation4]
    $region5: #{tpu_custom_call.1} parent=1 // pred_fallthru
      _
    // Predicated region
    $region6: #{tpu_custom_call.1} parent=1 // pred_check
      _
    $region7: #{tpu_custom_call.1} parent=1 // pred_check_branch
      %33 = sbr.rel (0) target = $region9
    $region8: #{tpu_custom_call.1} parent=1 // pred_region
      _
    $region9: #{tpu_custom_call.1} parent=1 // pred_fallthru
      _
    // Predicated region
    $region10: #{tpu_custom_call.1} parent=1 // pred_check
      _
    $region11: #{tpu_custom_call.1} parent=1 // pred_check_branch
      %35 = sbr.rel (0) target = $region13
    $region12: #{tpu_custom_call.1} parent=1 // pred_region
      _
    $region13: #{tpu_custom_call.1} parent=1 // pred_fallthru
      _
    // Predicated region
    $region14: #{tpu_custom_call.1} parent=1 // pred_check
      _
    $region15: #{tpu_custom_call.1} parent=1 // pred_check_branch
      %37 = sbr.rel (0) target = $region17
    $region16: #{tpu_custom_call.1} parent=1 // pred_region
      _
    $region17: #{tpu_custom_call.1} parent=1 // pred_fallthru
      _
    // Predicated region
    $region18: #{tpu_custom_call.1} parent=1 // pred_check
      _
    $region19: #{tpu_custom_call.1} parent=1 // pred_check_branch
      %39 = sbr.rel (0) target = $region21
    $region20: #{tpu_custom_call.1} parent=1 // pred_region
      _
    $region21: #{tpu_custom_call.1} parent=1 // pred_fallthru
      _
    // Predicated region
    $region22: #{tpu_custom_call.1} parent=1 // pred_check
      _
    $region23: #{tpu_custom_call.1} parent=1 // pred_check_branch
      %41 = sbr.rel (0) target = $region25
    $region24: #{tpu_custom_call.1} parent=1 // pred_region
      _
    $region25: #{tpu_custom_call.1} parent=1 // pred_fallthru
      _
    // Predicated region
    $region26: #{tpu_custom_call.1} parent=1 // pred_check
      _
    $region27: #{tpu_custom_call.1} parent=1 // pred_check_branch
      %43 = sbr.rel (0) target = $region29
    $region28: #{tpu_custom_call.1} parent=1 // pred_region
      _
    $region29: #{tpu_custom_call.1} parent=1 // pred_fallthru
      _
    // Predicated region
    $region30: #{tpu_custom_call.1} parent=1 // pred_check
      _
    $region31: #{tpu_custom_call.1} parent=1 // pred_check_branch
      %45 = sbr.rel (0) target = $region33
    $region32: #{tpu_custom_call.1} parent=1 // pred_region
      %s47 = ssub.s32 8192, 8192
      %48 = vsyncadd [#allocation7], %s47
      %s49 = sshll.u32 [#allocation6], 4
      %s50 = int_to_ptr.vmem [resolvable:$true] %s49
      %55 = dma.hbm_to_vmem [thread:$0]  %s7, 8192, %s50, [#allocation7], 256, 256, 16
    $region33: #{tpu_custom_call.1} parent=1 // pred_fallthru
      _
    // Predicated region
    $region34: #{tpu_custom_call.1} parent=1 // pred_check
      _
    $region35: #{tpu_custom_call.1} parent=1 // pred_check_branch
      %57 = sbr.rel (0) target = $region37
    $region36: #{tpu_custom_call.1} parent=1 // pred_region
      _
    $region37: #{tpu_custom_call.1} parent=1 // pred_fallthru
      _
    // Predicated region
    $region38: #{tpu_custom_call.1} parent=1 // pred_check
      _
    $region39: #{tpu_custom_call.1} parent=1 // pred_check_branch
      %59 = sbr.rel (0) target = $region41
    $region40: #{tpu_custom_call.1} parent=1 // pred_region
      %s61 = ssub.s32 2048, 2048
      %62 = vsyncadd [#allocation7], %s61
      %s63 = sshll.u32 [#allocation8], 4
      %s64 = int_to_ptr.vmem [resolvable:$true] %s63
      %69 = dma.hbm_to_vmem [thread:$0]  %s9, 2048, %s64, [#allocation7], 128, 128, 8
    $region41: #{tpu_custom_call.1} parent=1 // pred_fallthru
      _
    // Predicated region
    $region42: #{tpu_custom_call.1} parent=1 // pred_check
      _
    $region43: #{tpu_custom_call.1} parent=1 // pred_check_branch
      %71 = sbr.rel (0) target = $region45
    $region44: #{tpu_custom_call.1} parent=1 // pred_region
      _
    $region45: #{tpu_custom_call.1} parent=1 // pred_fallthru
      _
    // Predicated region
    $region46: #{tpu_custom_call.1} parent=1 // pred_check
      _
    $region47: #{tpu_custom_call.1} parent=1 // pred_check_branch
      %73 = sbr.rel (0) target = $region49
    $region48: #{tpu_custom_call.1} parent=1 // pred_region
      %s75 = ssub.s32 2048, 2048
      %76 = vsyncadd [#allocation10], %s75
      %s77 = sshll.u32 [#allocation9], 4
      %s78 = int_to_ptr.vmem [resolvable:$true] %s77
      %83 = dma.hbm_to_vmem [thread:$0]  %s11, 2048, %s78, [#allocation10], 128, 128, 8
    $region49: #{tpu_custom_call.1} parent=1 // pred_fallthru
      _
    // Predicated region
    $region50: #{tpu_custom_call.1} parent=1 // pred_check
      _
    $region51: #{tpu_custom_call.1} parent=1 // pred_check_branch
      %85 = sbr.rel (0) target = $region53
    $region52: #{tpu_custom_call.1} parent=1 // pred_region
      _
    $region53: #{tpu_custom_call.1} parent=1 // pred_fallthru
      _
    // Predicated region
    $region54: #{tpu_custom_call.1} parent=1 // pred_check
      _
    $region55: #{tpu_custom_call.1} parent=1 // pred_check_branch
      %87 = sbr.rel (0) target = $region57
    $region56: #{tpu_custom_call.1} parent=1 // pred_region
      %88 = dma.done [#allocation4], 128
    $region57: #{tpu_custom_call.1} parent=1 // pred_fallthru
      _
    // Predicated region
    $region58: #{tpu_custom_call.1} parent=1 // pred_check
      _
    $region59: #{tpu_custom_call.1} parent=1 // pred_check_branch
      %90 = sbr.rel (0) target = $region61
    $region60: #{tpu_custom_call.1} parent=1 // pred_region
      %91 = dma.done [#allocation7], 8192
    $region61: #{tpu_custom_call.1} parent=1 // pred_fallthru
      _
    // Predicated region
    $region62: #{tpu_custom_call.1} parent=1 // pred_check
      _
    $region63: #{tpu_custom_call.1} parent=1 // pred_check_branch
      %93 = sbr.rel (0) target = $region65
    $region64: #{tpu_custom_call.1} parent=1 // pred_region
      %94 = dma.done [#allocation7], 2048
    $region65: #{tpu_custom_call.1} parent=1 // pred_fallthru
      _
    // Predicated region
    $region66: #{tpu_custom_call.1} parent=1 // pred_check
      _
    $region67: #{tpu_custom_call.1} parent=1 // pred_check_branch
      %96 = sbr.rel (0) target = $region69
    $region68: #{tpu_custom_call.1} parent=1 // pred_region
      %97 = dma.done [#allocation10], 2048
    $region69: #{tpu_custom_call.1} parent=1 // pred_fallthru
      _
    %p98 = scmp.eq.s32.totalorder 0, 0
    // Predicated region
    $region70: #{tpu_custom_call.1} parent=1 // pred_check
      %p99 = pneg %p98
    $region71: #{tpu_custom_call.1} parent=1 // pred_check_branch
      %101 = sbr.rel (%p99) target = $region73
    $region72: #{tpu_custom_call.1} parent=1 // pred_region
      %102 = vst [vmem:[#allocation2] sm:$0xff] 0.0
    $region73: #{tpu_custom_call.1} parent=1 // pred_fallthru
      _
    %v103 = vld [vmem:[%s2] sm:$0xff]
    %v104 = vld [vmem:[%s2 + $0x8] sm:$0xff]
    %v105 = vld [vmem:[%s2 + $0x10] sm:$0xff]
    %v106 = vld [vmem:[%s2 + $0x18] sm:$0xff]
    %v107 = vld [vmem:[%s2 + $0x20] sm:$0xff]
    %v108 = vld [vmem:[%s2 + $0x28] sm:$0xff]
    %v109 = vld [vmem:[%s2 + $0x30] sm:$0xff]
    %v110 = vld [vmem:[%s2 + $0x38] sm:$0xff]
    %v111 = vld [vmem:[%s2 + $0x40] sm:$0xff]
    %v112 = vld [vmem:[%s2 + $0x48] sm:$0xff]
    %v113 = vld [vmem:[%s2 + $0x50] sm:$0xff]
    %v114 = vld [vmem:[%s2 + $0x58] sm:$0xff]
    %v115 = vld [vmem:[%s2 + $0x60] sm:$0xff]
    %v116 = vld [vmem:[%s2 + $0x68] sm:$0xff]
    %v117 = vld [vmem:[%s2 + $0x70] sm:$0xff]
    %v118 = vld [vmem:[%s2 + $0x78] sm:$0xff]
    %v119 = vld [vmem:[%s3] sm:$0x1]
    %v120 = vlaneseq
    %v121 = vand.u32 %v120, 127
    %122 = vset.pattern.permute.xlu0 0
    %123 = vperm.xlu0 %122, %v103
    %v124 = vpop.permute.xlu0 %123
    %125 = vset.pattern.permute.xlu0 0
    %126 = vperm.xlu0 %125, %v104
    %v127 = vpop.permute.xlu0 %126
    %128 = vset.pattern.permute.xlu0 0
    %129 = vperm.xlu0 %128, %v105
    %v130 = vpop.permute.xlu0 %129
    %131 = vset.pattern.permute.xlu0 0
    %132 = vperm.xlu0 %131, %v106
    %v133 = vpop.permute.xlu0 %132
    %134 = vset.pattern.permute.xlu0 0
    %135 = vperm.xlu0 %134, %v107
    %v136 = vpop.permute.xlu0 %135
    %137 = vset.pattern.permute.xlu0 0
    %138 = vperm.xlu0 %137, %v108
    %v139 = vpop.permute.xlu0 %138
    %140 = vset.pattern.permute.xlu0 0
    %141 = vperm.xlu0 %140, %v109
    %v142 = vpop.permute.xlu0 %141
    %143 = vset.pattern.permute.xlu0 0
    %144 = vperm.xlu0 %143, %v110
    %v145 = vpop.permute.xlu0 %144
    %146 = vset.pattern.permute.xlu0 0
    %147 = vperm.xlu0 %146, %v111
    %v148 = vpop.permute.xlu0 %147
    %149 = vset.pattern.permute.xlu0 0
    %150 = vperm.xlu0 %149, %v112
    %v151 = vpop.permute.xlu0 %150
    %152 = vset.pattern.permute.xlu0 0
    %153 = vperm.xlu0 %152, %v113
    %v154 = vpop.permute.xlu0 %153
    %155 = vset.pattern.permute.xlu0 0
    %156 = vperm.xlu0 %155, %v114
    %v157 = vpop.permute.xlu0 %156
    %158 = vset.pattern.permute.xlu0 0
    %159 = vperm.xlu0 %158, %v115
    %v160 = vpop.permute.xlu0 %159
    %161 = vset.pattern.permute.xlu0 0
    %162 = vperm.xlu0 %161, %v116
    %v163 = vpop.permute.xlu0 %162
    %164 = vset.pattern.permute.xlu0 0
    %165 = vperm.xlu0 %164, %v117
    %v166 = vpop.permute.xlu0 %165
    %167 = vset.pattern.permute.xlu0 0
    %168 = vperm.xlu0 %167, %v118
    %v169 = vpop.permute.xlu0 %168
    %vm170 = vcmp.eq.s32.totalorder %v121, %v124
    %vm171 = vcmp.eq.s32.totalorder %v121, %v127
    %vm172 = vcmp.eq.s32.totalorder %v121, %v130
    %vm173 = vcmp.eq.s32.totalorder %v121, %v133
    %vm174 = vcmp.eq.s32.totalorder %v121, %v136
    %vm175 = vcmp.eq.s32.totalorder %v121, %v139
    %vm176 = vcmp.eq.s32.totalorder %v121, %v142
    %vm177 = vcmp.eq.s32.totalorder %v121, %v145
    %vm178 = vcmp.eq.s32.totalorder %v121, %v148
    %vm179 = vcmp.eq.s32.totalorder %v121, %v151
    %vm180 = vcmp.eq.s32.totalorder %v121, %v154
    %vm181 = vcmp.eq.s32.totalorder %v121, %v157
    %vm182 = vcmp.eq.s32.totalorder %v121, %v160
    %vm183 = vcmp.eq.s32.totalorder %v121, %v163
    %vm184 = vcmp.eq.s32.totalorder %v121, %v166
    %vm185 = vcmp.eq.s32.totalorder %v121, %v169
    %v186 = vsel %vm170, 1, 0
    %v187 = vsel %vm171, 1, 0
    %v188 = vsel %vm172, 1, 0
    %v189 = vsel %vm173, 1, 0
    %v190 = vsel %vm174, 1, 0
    %v191 = vsel %vm175, 1, 0
    %v192 = vsel %vm176, 1, 0
    %v193 = vsel %vm177, 1, 0
    %v194 = vsel %vm178, 1, 0
    %v195 = vsel %vm179, 1, 0
    %v196 = vsel %vm180, 1, 0
    %v197 = vsel %vm181, 1, 0
    %v198 = vsel %vm182, 1, 0
    %v199 = vsel %vm183, 1, 0
    %v200 = vsel %vm184, 1, 0
    %v201 = vsel %vm185, 1, 0
    %v202 = vcvt.s32.f32 %v186
    %v203 = vcvt.s32.f32 %v187
    %v204 = vcvt.s32.f32 %v188
    %v205 = vcvt.s32.f32 %v189
    %v206 = vcvt.s32.f32 %v190
    %v207 = vcvt.s32.f32 %v191
    %v208 = vcvt.s32.f32 %v192
    %v209 = vcvt.s32.f32 %v193
    %v210 = vcvt.s32.f32 %v194
    %v211 = vcvt.s32.f32 %v195
    %v212 = vcvt.s32.f32 %v196
    %v213 = vcvt.s32.f32 %v197
    %v214 = vcvt.s32.f32 %v198
    %v215 = vcvt.s32.f32 %v199
    %v216 = vcvt.s32.f32 %v200
    %v217 = vcvt.s32.f32 %v201
    %v218 = vld [vmem:[#allocation3] sm:$0xff]
    %vm219 = vcmask 64512
    %v221 = vsel %vm219, %v202, 0
    %v224 = vsel %vm219, %v203, 0
    %v227 = vsel %vm219, %v204, 0
    %v230 = vsel %vm219, %v205, 0
    %v233 = vsel %vm219, %v206, 0
    %v236 = vsel %vm219, %v207, 0
    %v239 = vsel %vm219, %v208, 0
    %v242 = vsel %vm219, %v209, 0
    %v245 = vsel %vm219, %v210, 0
    %v248 = vsel %vm219, %v211, 0
    %v251 = vsel %vm219, %v212, 0
    %v254 = vsel %vm219, %v213, 0
    %v257 = vsel %vm219, %v214, 0
    %v260 = vsel %vm219, %v215, 0
    %v263 = vsel %vm219, %v216, 0
    %v266 = vsel %vm219, %v217, 0
    %268 = vmatprep.subr.mxu0 0.0
    %269 = vmatpush1.msra.mxu0 %v218
    %270 = vmatprep.subr.mxu0 0.0
    %271 = vmatpush1.msra.mxu0 0.0
    %272 = vmatprep.subr.mxu0 0.0
    %273 = vmatpush1.msra.mxu0 0.0
    %274 = vmatprep.subr.mxu0 0.0
    %275 = vmatpush1.msra.mxu0 0.0
    %276 = vmatprep.subr.mxu0 0.0
    %277 = vmatpush1.msra.mxu0 0.0
    %278 = vmatprep.subr.mxu0 0.0
    %279 = vmatpush1.msra.mxu0 0.0
    %280 = vmatprep.subr.mxu0 0.0
    %281 = vmatpush1.msra.mxu0 0.0
    %282 = vmatprep.subr.mxu0 0.0
    %283 = vmatpush1.msra.mxu0 0.0
    %284 = vmatprep.subr.mxu0 0.0
    %285 = vmatpush1.msra.mxu0 0.0
    %286 = vmatprep.subr.mxu0 0.0
    %287 = vmatpush1.msra.mxu0 0.0
    %288 = vmatprep.subr.mxu0 0.0
    %289 = vmatpush1.msra.mxu0 0.0
    %290 = vmatprep.subr.mxu0 0.0
    %291 = vmatpush1.msra.mxu0 0.0
    %292 = vmatprep.subr.mxu0 0.0
    %293 = vmatpush1.msra.mxu0 0.0
    %294 = vmatprep.subr.mxu0 0.0
    %295 = vmatpush1.msra.mxu0 0.0
    %296 = vmatprep.subr.mxu0 0.0
    %297 = vmatpush1.msra.mxu0 0.0
    %298 = vmatprep.subr.mxu0 0.0
    %299 = vmatpush1.msra.mxu0 0.0
    %300 = vmatprep.subr.mxu0 0.0
    %301 = vmatpush1.msra.mxu0 0.0
    %302 = vmatprep.subr.mxu0 0.0
    %303 = vmatpush1.msra.mxu0 0.0
    %304 = vmatprep.subr.mxu0 0.0
    %305 = vmatpush1.msra.mxu0 0.0
    %306 = vmatprep.subr.mxu0 0.0
    %307 = vmatpush1.msra.mxu0 0.0
    %308 = vmatprep.subr.mxu0 0.0
    %309 = vmatpush1.msra.mxu0 0.0
    %310 = vmatprep.subr.mxu0 0.0
    %311 = vmatpush1.msra.mxu0 0.0
    %312 = vmatprep.subr.mxu0 0.0
    %313 = vmatpush1.msra.mxu0 0.0
    %314 = vmatprep.subr.mxu0 0.0
    %315 = vmatpush1.msra.mxu0 0.0
    %316 = vmatprep.subr.mxu0 0.0
    %317 = vmatpush1.msra.mxu0 0.0
    %318 = vmatprep.subr.mxu0 0.0
    %319 = vmatpush1.msra.mxu0 0.0
    %320 = vmatprep.subr.mxu0 0.0
    %321 = vmatpush1.msra.mxu0 0.0
    %322 = vmatprep.subr.mxu0 0.0
    %323 = vmatpush1.msra.mxu0 0.0
    %324 = vmatprep.subr.mxu0 0.0
    %325 = vmatpush1.msra.mxu0 0.0
    %326 = vmatprep.subr.mxu0 0.0
    %327 = vmatpush1.msra.mxu0 0.0
    %328 = vmatprep.subr.mxu0 0.0
    %329 = vmatpush1.msra.mxu0 0.0
    %330 = vmatprep.subr.mxu0 0.0
    %331 = vmatpush1.msra.mxu0 0.0
    %332 = vmatprep.mubr.f32.mxu0 0.0
    %333 = vmatmul.mubr.f32.gmra.mrb[0].mxu0 %v221
    %v334 = vpop.f32.mrb[0].mxu0
    %v335 = vadd.f32 0.0, %v334
    %v336 = vpop.f32.mrb[0].mxu0
    %337 = vmatprep.mubr.f32.mxu0 0.0
    %338 = vmatmul.mubr.f32.gmra.mrb[0].mxu0 %v224
    %v339 = vpop.f32.mrb[0].mxu0
    %v340 = vadd.f32 0.0, %v339
    %v341 = vpop.f32.mrb[0].mxu0
    %342 = vmatprep.mubr.f32.mxu0 0.0
    %343 = vmatmul.mubr.f32.gmra.mrb[0].mxu0 %v227
    %v344 = vpop.f32.mrb[0].mxu0
    %v345 = vadd.f32 0.0, %v344
    %v346 = vpop.f32.mrb[0].mxu0
    %347 = vmatprep.mubr.f32.mxu0 0.0
    %348 = vmatmul.mubr.f32.gmra.mrb[0].mxu0 %v230
    %v349 = vpop.f32.mrb[0].mxu0
    %v350 = vadd.f32 0.0, %v349
    %v351 = vpop.f32.mrb[0].mxu0
    %352 = vmatprep.mubr.f32.mxu0 0.0
    %353 = vmatmul.mubr.f32.gmra.mrb[0].mxu0 %v233
    %v354 = vpop.f32.mrb[0].mxu0
    %v355 = vadd.f32 0.0, %v354
    %v356 = vpop.f32.mrb[0].mxu0
    %357 = vmatprep.mubr.f32.mxu0 0.0
    %358 = vmatmul.mubr.f32.gmra.mrb[0].mxu0 %v236
    %v359 = vpop.f32.mrb[0].mxu0
    %v360 = vadd.f32 0.0, %v359
    %v361 = vpop.f32.mrb[0].mxu0
    %362 = vmatprep.mubr.f32.mxu0 0.0
    %363 = vmatmul.mubr.f32.gmra.mrb[0].mxu0 %v239
    %v364 = vpop.f32.mrb[0].mxu0
    %v365 = vadd.f32 0.0, %v364
    %v366 = vpop.f32.mrb[0].mxu0
    %367 = vmatprep.mubr.f32.mxu0 0.0
    %368 = vmatmul.mubr.f32.gmra.mrb[0].mxu0 %v242
    %v369 = vpop.f32.mrb[0].mxu0
    %v370 = vadd.f32 0.0, %v369
    %v371 = vpop.f32.mrb[0].mxu0
    %372 = vmatprep.mubr.f32.mxu0 0.0
    %373 = vmatmul.mubr.f32.gmra.mrb[0].mxu0 %v245
    %v374 = vpop.f32.mrb[0].mxu0
    %v375 = vadd.f32 0.0, %v374
    %v376 = vpop.f32.mrb[0].mxu0
    %377 = vmatprep.mubr.f32.mxu0 0.0
    %378 = vmatmul.mubr.f32.gmra.mrb[0].mxu0 %v248
    %v379 = vpop.f32.mrb[0].mxu0
    %v380 = vadd.f32 0.0, %v379
    %v381 = vpop.f32.mrb[0].mxu0
    %382 = vmatprep.mubr.f32.mxu0 0.0
    %383 = vmatmul.mubr.f32.gmra.mrb[0].mxu0 %v251
    %v384 = vpop.f32.mrb[0].mxu0
    %v385 = vadd.f32 0.0, %v384
    %v386 = vpop.f32.mrb[0].mxu0
    %387 = vmatprep.mubr.f32.mxu0 0.0
    %388 = vmatmul.mubr.f32.gmra.mrb[0].mxu0 %v254
    %v389 = vpop.f32.mrb[0].mxu0
    %v390 = vadd.f32 0.0, %v389
    %v391 = vpop.f32.mrb[0].mxu0
    %392 = vmatprep.mubr.f32.mxu0 0.0
    %393 = vmatmul.mubr.f32.gmra.mrb[0].mxu0 %v257
    %v394 = vpop.f32.mrb[0].mxu0
    %v395 = vadd.f32 0.0, %v394
    %v396 = vpop.f32.mrb[0].mxu0
    %397 = vmatprep.mubr.f32.mxu0 0.0
    %398 = vmatmul.mubr.f32.gmra.mrb[0].mxu0 %v260
    %v399 = vpop.f32.mrb[0].mxu0
    %v400 = vadd.f32 0.0, %v399
    %v401 = vpop.f32.mrb[0].mxu0
    %402 = vmatprep.mubr.f32.mxu0 0.0
    %403 = vmatmul.mubr.f32.gmra.mrb[0].mxu0 %v263
    %v404 = vpop.f32.mrb[0].mxu0
    %v405 = vadd.f32 0.0, %v404
    %v406 = vpop.f32.mrb[0].mxu0
    %407 = vmatprep.mubr.f32.mxu0 0.0
    %408 = vmatmul.mubr.f32.gmra.mrb[0].mxu0 %v266
    %v409 = vpop.f32.mrb[0].mxu0
    %v410 = vadd.f32 0.0, %v409
    %v411 = vpop.f32.mrb[0].mxu0
    %412 = vdwg.mxu0
    %v413 = vld [vmem:[%s1] sm:$0xff]
    %v414 = vld [vmem:[%s1 + $0x8] sm:$0xff]
    %v415 = vld [vmem:[%s1 + $0x10] sm:$0xff]
    %v416 = vld [vmem:[%s1 + $0x18] sm:$0xff]
    %v417 = vld [vmem:[%s1 + $0x20] sm:$0xff]
    %v418 = vld [vmem:[%s1 + $0x28] sm:$0xff]
    %v419 = vld [vmem:[%s1 + $0x30] sm:$0xff]
    %v420 = vld [vmem:[%s1 + $0x38] sm:$0xff]
    %v421 = vld [vmem:[%s1 + $0x40] sm:$0xff]
    %v422 = vld [vmem:[%s1 + $0x48] sm:$0xff]
    %v423 = vld [vmem:[%s1 + $0x50] sm:$0xff]
    %v424 = vld [vmem:[%s1 + $0x58] sm:$0xff]
    %v425 = vld [vmem:[%s1 + $0x60] sm:$0xff]
    %v426 = vld [vmem:[%s1 + $0x68] sm:$0xff]
    %v427 = vld [vmem:[%s1 + $0x70] sm:$0xff]
    %v428 = vld [vmem:[%s1 + $0x78] sm:$0xff]
    %v429 = vld [vmem:[%s4] sm:$0xff]
    %v430 = vld [vmem:[%s4 + $0x8] sm:$0xff]
    %v431 = vld [vmem:[%s4 + $0x10] sm:$0xff]
    %v432 = vld [vmem:[%s4 + $0x18] sm:$0xff]
    %v433 = vld [vmem:[%s5] sm:$0xff]
    %v434 = vld [vmem:[%s5 + $0x8] sm:$0xff]
    %v435 = vld [vmem:[%s5 + $0x10] sm:$0xff]
    %v436 = vld [vmem:[%s5 + $0x18] sm:$0xff]
    %v437 = vld [vmem:[%s5 + $0x20] sm:$0xff]
    %v438 = vld [vmem:[%s5 + $0x28] sm:$0xff]
    %v439 = vld [vmem:[%s5 + $0x30] sm:$0xff]
    %v440 = vld [vmem:[%s5 + $0x38] sm:$0xff]
    %v441 = vld [vmem:[%s5 + $0x40] sm:$0xff]
    %v442 = vld [vmem:[%s5 + $0x48] sm:$0xff]
    %v443 = vld [vmem:[%s5 + $0x50] sm:$0xff]
    %v444 = vld [vmem:[%s5 + $0x58] sm:$0xff]
    %v445 = vld [vmem:[%s5 + $0x60] sm:$0xff]
    %v446 = vld [vmem:[%s5 + $0x68] sm:$0xff]
    %v447 = vld [vmem:[%s5 + $0x70] sm:$0xff]
    %v448 = vld [vmem:[%s5 + $0x78] sm:$0xff]
    %v449 = vld [vmem:[%s5 + $0x80] sm:$0xff]
    %v450 = vld [vmem:[%s5 + $0x88] sm:$0xff]
    %v451 = vld [vmem:[%s5 + $0x90] sm:$0xff]
    %v452 = vld [vmem:[%s5 + $0x98] sm:$0xff]
    %v453 = vld [vmem:[%s5 + $0xa0] sm:$0xff]
    %v454 = vld [vmem:[%s5 + $0xa8] sm:$0xff]
    %v455 = vld [vmem:[%s5 + $0xb0] sm:$0xff]
    %v456 = vld [vmem:[%s5 + $0xb8] sm:$0xff]
    %v457 = vld [vmem:[%s5 + $0xc0] sm:$0xff]
    %v458 = vld [vmem:[%s5 + $0xc8] sm:$0xff]
    %v459 = vld [vmem:[%s5 + $0xd0] sm:$0xff]
    %v460 = vld [vmem:[%s5 + $0xd8] sm:$0xff]
    %v461 = vld [vmem:[%s5 + $0xe0] sm:$0xff]
    %v462 = vld [vmem:[%s5 + $0xe8] sm:$0xff]
    %v463 = vld [vmem:[%s5 + $0xf0] sm:$0xff]
    %v464 = vld [vmem:[%s5 + $0xf8] sm:$0xff]
    %465 = vmatprep.subr.mxu0 %v434
    %466 = vmatpush1.msra.mxu0 %v433
    %467 = vmatprep.subr.mxu0 %v436
    %468 = vmatpush1.msra.mxu0 %v435
    %469 = vmatprep.subr.mxu0 %v438
    %470 = vmatpush1.msra.mxu0 %v437
    %471 = vmatprep.subr.mxu0 %v440
    %472 = vmatpush1.msra.mxu0 %v439
    %473 = vmatprep.subr.mxu0 %v442
    %474 = vmatpush1.msra.mxu0 %v441
    %475 = vmatprep.subr.mxu0 %v444
    %476 = vmatpush1.msra.mxu0 %v443
    %477 = vmatprep.subr.mxu0 %v446
    %478 = vmatpush1.msra.mxu0 %v445
    %479 = vmatprep.subr.mxu0 %v448
    %480 = vmatpush1.msra.mxu0 %v447
    %481 = vmatprep.subr.mxu0 %v450
    %482 = vmatpush1.msra.mxu0 %v449
    %483 = vmatprep.subr.mxu0 %v452
    %484 = vmatpush1.msra.mxu0 %v451
    %485 = vmatprep.subr.mxu0 %v454
    %486 = vmatpush1.msra.mxu0 %v453
    %487 = vmatprep.subr.mxu0 %v456
    %488 = vmatpush1.msra.mxu0 %v455
    %489 = vmatprep.subr.mxu0 %v458
    %490 = vmatpush1.msra.mxu0 %v457
    %491 = vmatprep.subr.mxu0 %v460
    %492 = vmatpush1.msra.mxu0 %v459
    %493 = vmatprep.subr.mxu0 %v462
    %494 = vmatpush1.msra.mxu0 %v461
    %495 = vmatprep.subr.mxu0 %v464
    %496 = vmatpush1.msra.mxu0 %v463
    %497 = vmatprep.subr.mxu0 0.0
    %498 = vmatpush1.msra.mxu0 0.0
    %499 = vmatprep.subr.mxu0 0.0
    %500 = vmatpush1.msra.mxu0 0.0
    %501 = vmatprep.subr.mxu0 0.0
    %502 = vmatpush1.msra.mxu0 0.0
    %503 = vmatprep.subr.mxu0 0.0
    %504 = vmatpush1.msra.mxu0 0.0
    %505 = vmatprep.subr.mxu0 0.0
    %506 = vmatpush1.msra.mxu0 0.0
    %507 = vmatprep.subr.mxu0 0.0
    %508 = vmatpush1.msra.mxu0 0.0
    %509 = vmatprep.subr.mxu0 0.0
    %510 = vmatpush1.msra.mxu0 0.0
    %511 = vmatprep.subr.mxu0 0.0
    %512 = vmatpush1.msra.mxu0 0.0
    %513 = vmatprep.subr.mxu0 0.0
    %514 = vmatpush1.msra.mxu0 0.0
    %515 = vmatprep.subr.mxu0 0.0
    %516 = vmatpush1.msra.mxu0 0.0
    %517 = vmatprep.subr.mxu0 0.0
    %518 = vmatpush1.msra.mxu0 0.0
    %519 = vmatprep.subr.mxu0 0.0
    %520 = vmatpush1.msra.mxu0 0.0
    %521 = vmatprep.subr.mxu0 0.0
    %522 = vmatpush1.msra.mxu0 0.0
    %523 = vmatprep.subr.mxu0 0.0
    %524 = vmatpush1.msra.mxu0 0.0
    %525 = vmatprep.subr.mxu0 0.0
    %526 = vmatpush1.msra.mxu0 0.0
    %527 = vmatprep.subr.mxu0 0.0
    %528 = vmatpush1.msra.mxu0 0.0
    %529 = vmatprep.mubr.f32.mxu0 0.0
    %530 = vmatmul.mubr.f32.gmra.mrb[0].mxu0 %v335
    %v531 = vpop.f32.mrb[0].mxu0
    %v532 = vadd.f32 0.0, %v531
    %v533 = vpop.f32.mrb[0].mxu0
    %v534 = vadd.f32 0.0, %v533
    %535 = vmatprep.mubr.f32.mxu0 0.0
    %536 = vmatmul.mubr.f32.gmra.mrb[0].mxu0 %v340
    %v537 = vpop.f32.mrb[0].mxu0
    %v538 = vadd.f32 0.0, %v537
    %v539 = vpop.f32.mrb[0].mxu0
    %v540 = vadd.f32 0.0, %v539
    %541 = vmatprep.mubr.f32.mxu0 0.0
    %542 = vmatmul.mubr.f32.gmra.mrb[0].mxu0 %v345
    %v543 = vpop.f32.mrb[0].mxu0
    %v544 = vadd.f32 0.0, %v543
    %v545 = vpop.f32.mrb[0].mxu0
    %v546 = vadd.f32 0.0, %v545
    %547 = vmatprep.mubr.f32.mxu0 0.0
    %548 = vmatmul.mubr.f32.gmra.mrb[0].mxu0 %v350
    %v549 = vpop.f32.mrb[0].mxu0
    %v550 = vadd.f32 0.0, %v549
    %v551 = vpop.f32.mrb[0].mxu0
    %v552 = vadd.f32 0.0, %v551
    %553 = vmatprep.mubr.f32.mxu0 0.0
    %554 = vmatmul.mubr.f32.gmra.mrb[0].mxu0 %v355
    %v555 = vpop.f32.mrb[0].mxu0
    %v556 = vadd.f32 0.0, %v555
    %v557 = vpop.f32.mrb[0].mxu0
    %v558 = vadd.f32 0.0, %v557
    %559 = vmatprep.mubr.f32.mxu0 0.0
    %560 = vmatmul.mubr.f32.gmra.mrb[0].mxu0 %v360
    %v561 = vpop.f32.mrb[0].mxu0
    %v562 = vadd.f32 0.0, %v561
    %v563 = vpop.f32.mrb[0].mxu0
    %v564 = vadd.f32 0.0, %v563
    %565 = vmatprep.mubr.f32.mxu0 0.0
    %566 = vmatmul.mubr.f32.gmra.mrb[0].mxu0 %v365
    %v567 = vpop.f32.mrb[0].mxu0
    %v568 = vadd.f32 0.0, %v567
    %v569 = vpop.f32.mrb[0].mxu0
    %v570 = vadd.f32 0.0, %v569
    %571 = vmatprep.mubr.f32.mxu0 0.0
    %572 = vmatmul.mubr.f32.gmra.mrb[0].mxu0 %v370
    %v573 = vpop.f32.mrb[0].mxu0
    %v574 = vadd.f32 0.0, %v573
    %v575 = vpop.f32.mrb[0].mxu0
    %v576 = vadd.f32 0.0, %v575
    %577 = vmatprep.mubr.f32.mxu0 0.0
    %578 = vmatmul.mubr.f32.gmra.mrb[0].mxu0 %v375
    %v579 = vpop.f32.mrb[0].mxu0
    %v580 = vadd.f32 0.0, %v579
    %v581 = vpop.f32.mrb[0].mxu0
    %v582 = vadd.f32 0.0, %v581
    %583 = vmatprep.mubr.f32.mxu0 0.0
    %584 = vmatmul.mubr.f32.gmra.mrb[0].mxu0 %v380
    %v585 = vpop.f32.mrb[0].mxu0
    %v586 = vadd.f32 0.0, %v585
    %v587 = vpop.f32.mrb[0].mxu0
    %v588 = vadd.f32 0.0, %v587
    %589 = vmatprep.mubr.f32.mxu0 0.0
    %590 = vmatmul.mubr.f32.gmra.mrb[0].mxu0 %v385
    %v591 = vpop.f32.mrb[0].mxu0
    %v592 = vadd.f32 0.0, %v591
    %v593 = vpop.f32.mrb[0].mxu0
    %v594 = vadd.f32 0.0, %v593
    %595 = vmatprep.mubr.f32.mxu0 0.0
    %596 = vmatmul.mubr.f32.gmra.mrb[0].mxu0 %v390
    %v597 = vpop.f32.mrb[0].mxu0
    %v598 = vadd.f32 0.0, %v597
    %v599 = vpop.f32.mrb[0].mxu0
    %v600 = vadd.f32 0.0, %v599
    %601 = vmatprep.mubr.f32.mxu0 0.0
    %602 = vmatmul.mubr.f32.gmra.mrb[0].mxu0 %v395
    %v603 = vpop.f32.mrb[0].mxu0
    %v604 = vadd.f32 0.0, %v603
    %v605 = vpop.f32.mrb[0].mxu0
    %v606 = vadd.f32 0.0, %v605
    %607 = vmatprep.mubr.f32.mxu0 0.0
    %608 = vmatmul.mubr.f32.gmra.mrb[0].mxu0 %v400
    %v609 = vpop.f32.mrb[0].mxu0
    %v610 = vadd.f32 0.0, %v609
    %v611 = vpop.f32.mrb[0].mxu0
    %v612 = vadd.f32 0.0, %v611
    %613 = vmatprep.mubr.f32.mxu0 0.0
    %614 = vmatmul.mubr.f32.gmra.mrb[0].mxu0 %v405
    %v615 = vpop.f32.mrb[0].mxu0
    %v616 = vadd.f32 0.0, %v615
    %v617 = vpop.f32.mrb[0].mxu0
    %v618 = vadd.f32 0.0, %v617
    %619 = vmatprep.mubr.f32.mxu0 0.0
    %620 = vmatmul.mubr.f32.gmra.mrb[0].mxu0 %v410
    %v621 = vpop.f32.mrb[0].mxu0
    %v622 = vadd.f32 0.0, %v621
    %v623 = vpop.f32.mrb[0].mxu0
    %v624 = vadd.f32 0.0, %v623
    %625 = vdwg.mxu0
    %vm626 = vcmask 130048
    %v628 = vsel %vm626, %v413, 0
    %v631 = vsel %vm626, %v414, 0
    %v634 = vsel %vm626, %v415, 0
    %v637 = vsel %vm626, %v416, 0
    %v640 = vsel %vm626, %v417, 0
    %v643 = vsel %vm626, %v418, 0
    %v646 = vsel %vm626, %v419, 0
    %v649 = vsel %vm626, %v420, 0
    %v652 = vsel %vm626, %v421, 0
    %v655 = vsel %vm626, %v422, 0
    %v658 = vsel %vm626, %v423, 0
    %v661 = vsel %vm626, %v424, 0
    %v664 = vsel %vm626, %v425, 0
    %v667 = vsel %vm626, %v426, 0
    %v670 = vsel %vm626, %v427, 0
    %v673 = vsel %vm626, %v428, 0
    %675 = vmatprep.subr.mxu0 %v430
    %676 = vmatpush1.msra.mxu0 %v429
    %677 = vmatprep.subr.mxu0 %v432
    %678 = vmatpush1.msra.mxu0 %v431
    %679 = vmatprep.subr.mxu0 0.0
    %680 = vmatpush1.msra.mxu0 0.0
    %681 = vmatprep.subr.mxu0 0.0
    %682 = vmatpush1.msra.mxu0 0.0
    %683 = vmatprep.subr.mxu0 0.0
    %684 = vmatpush1.msra.mxu0 0.0
    %685 = vmatprep.subr.mxu0 0.0
    %686 = vmatpush1.msra.mxu0 0.0
    %687 = vmatprep.subr.mxu0 0.0
    %688 = vmatpush1.msra.mxu0 0.0
    %689 = vmatprep.subr.mxu0 0.0
    %690 = vmatpush1.msra.mxu0 0.0
    %691 = vmatprep.subr.mxu0 0.0
    %692 = vmatpush1.msra.mxu0 0.0
    %693 = vmatprep.subr.mxu0 0.0
    %694 = vmatpush1.msra.mxu0 0.0
    %695 = vmatprep.subr.mxu0 0.0
    %696 = vmatpush1.msra.mxu0 0.0
    %697 = vmatprep.subr.mxu0 0.0
    %698 = vmatpush1.msra.mxu0 0.0
    %699 = vmatprep.subr.mxu0 0.0
    %700 = vmatpush1.msra.mxu0 0.0
    %701 = vmatprep.subr.mxu0 0.0
    %702 = vmatpush1.msra.mxu0 0.0
    %703 = vmatprep.subr.mxu0 0.0
    %704 = vmatpush1.msra.mxu0 0.0
    %705 = vmatprep.subr.mxu0 0.0
    %706 = vmatpush1.msra.mxu0 0.0
    %707 = vmatprep.subr.mxu0 0.0
    %708 = vmatpush1.msra.mxu0 0.0
    %709 = vmatprep.subr.mxu0 0.0
    %710 = vmatpush1.msra.mxu0 0.0
    %711 = vmatprep.subr.mxu0 0.0
    %712 = vmatpush1.msra.mxu0 0.0
    %713 = vmatprep.subr.mxu0 0.0
    %714 = vmatpush1.msra.mxu0 0.0
    %715 = vmatprep.subr.mxu0 0.0
    %716 = vmatpush1.msra.mxu0 0.0
    %717 = vmatprep.subr.mxu0 0.0
    %718 = vmatpush1.msra.mxu0 0.0
    %719 = vmatprep.subr.mxu0 0.0
    %720 = vmatpush1.msra.mxu0 0.0
    %721 = vmatprep.subr.mxu0 0.0
    %722 = vmatpush1.msra.mxu0 0.0
    %723 = vmatprep.subr.mxu0 0.0
    %724 = vmatpush1.msra.mxu0 0.0
    %725 = vmatprep.subr.mxu0 0.0
    %726 = vmatpush1.msra.mxu0 0.0
    %727 = vmatprep.subr.mxu0 0.0
    %728 = vmatpush1.msra.mxu0 0.0
    %729 = vmatprep.subr.mxu0 0.0
    %730 = vmatpush1.msra.mxu0 0.0
    %731 = vmatprep.subr.mxu0 0.0
    %732 = vmatpush1.msra.mxu0 0.0
    %733 = vmatprep.subr.mxu0 0.0
    %734 = vmatpush1.msra.mxu0 0.0
    %735 = vmatprep.subr.mxu0 0.0
    %736 = vmatpush1.msra.mxu0 0.0
    %737 = vmatprep.subr.mxu0 0.0
    %738 = vmatpush1.msra.mxu0 0.0
    %739 = vmatprep.mubr.f32.mxu0 0.0
    %740 = vmatmul.mubr.f32.gmra.mrb[0].mxu0 %v628
    %v741 = vpop.f32.mrb[0].mxu0
    %v742 = vadd.f32 %v532, %v741
    %v743 = vpop.f32.mrb[0].mxu0
    %v744 = vadd.f32 %v534, %v743
    %745 = vmatprep.mubr.f32.mxu0 0.0
    %746 = vmatmul.mubr.f32.gmra.mrb[0].mxu0 %v631
    %v747 = vpop.f32.mrb[0].mxu0
    %v748 = vadd.f32 %v538, %v747
    %v749 = vpop.f32.mrb[0].mxu0
    %v750 = vadd.f32 %v540, %v749
    %751 = vmatprep.mubr.f32.mxu0 0.0
    %752 = vmatmul.mubr.f32.gmra.mrb[0].mxu0 %v634
    %v753 = vpop.f32.mrb[0].mxu0
    %v754 = vadd.f32 %v544, %v753
    %v755 = vpop.f32.mrb[0].mxu0
    %v756 = vadd.f32 %v546, %v755
    %757 = vmatprep.mubr.f32.mxu0 0.0
    %758 = vmatmul.mubr.f32.gmra.mrb[0].mxu0 %v637
    %v759 = vpop.f32.mrb[0].mxu0
    %v760 = vadd.f32 %v550, %v759
    %v761 = vpop.f32.mrb[0].mxu0
    %v762 = vadd.f32 %v552, %v761
    %763 = vmatprep.mubr.f32.mxu0 0.0
    %764 = vmatmul.mubr.f32.gmra.mrb[0].mxu0 %v640
    %v765 = vpop.f32.mrb[0].mxu0
    %v766 = vadd.f32 %v556, %v765
    %v767 = vpop.f32.mrb[0].mxu0
    %v768 = vadd.f32 %v558, %v767
    %769 = vmatprep.mubr.f32.mxu0 0.0
    %770 = vmatmul.mubr.f32.gmra.mrb[0].mxu0 %v643
    %v771 = vpop.f32.mrb[0].mxu0
    %v772 = vadd.f32 %v562, %v771
    %v773 = vpop.f32.mrb[0].mxu0
    %v774 = vadd.f32 %v564, %v773
    %775 = vmatprep.mubr.f32.mxu0 0.0
    %776 = vmatmul.mubr.f32.gmra.mrb[0].mxu0 %v646
    %v777 = vpop.f32.mrb[0].mxu0
    %v778 = vadd.f32 %v568, %v777
    %v779 = vpop.f32.mrb[0].mxu0
    %v780 = vadd.f32 %v570, %v779
    %781 = vmatprep.mubr.f32.mxu0 0.0
    %782 = vmatmul.mubr.f32.gmra.mrb[0].mxu0 %v649
    %v783 = vpop.f32.mrb[0].mxu0
    %v784 = vadd.f32 %v574, %v783
    %v785 = vpop.f32.mrb[0].mxu0
    %v786 = vadd.f32 %v576, %v785
    %787 = vmatprep.mubr.f32.mxu0 0.0
    %788 = vmatmul.mubr.f32.gmra.mrb[0].mxu0 %v652
    %v789 = vpop.f32.mrb[0].mxu0
    %v790 = vadd.f32 %v580, %v789
    %v791 = vpop.f32.mrb[0].mxu0
    %v792 = vadd.f32 %v582, %v791
    %793 = vmatprep.mubr.f32.mxu0 0.0
    %794 = vmatmul.mubr.f32.gmra.mrb[0].mxu0 %v655
    %v795 = vpop.f32.mrb[0].mxu0
    %v796 = vadd.f32 %v586, %v795
    %v797 = vpop.f32.mrb[0].mxu0
    %v798 = vadd.f32 %v588, %v797
    %799 = vmatprep.mubr.f32.mxu0 0.0
    %800 = vmatmul.mubr.f32.gmra.mrb[0].mxu0 %v658
    %v801 = vpop.f32.mrb[0].mxu0
    %v802 = vadd.f32 %v592, %v801
    %v803 = vpop.f32.mrb[0].mxu0
    %v804 = vadd.f32 %v594, %v803
    %805 = vmatprep.mubr.f32.mxu0 0.0
    %806 = vmatmul.mubr.f32.gmra.mrb[0].mxu0 %v661
    %v807 = vpop.f32.mrb[0].mxu0
    %v808 = vadd.f32 %v598, %v807
    %v809 = vpop.f32.mrb[0].mxu0
    %v810 = vadd.f32 %v600, %v809
    %811 = vmatprep.mubr.f32.mxu0 0.0
    %812 = vmatmul.mubr.f32.gmra.mrb[0].mxu0 %v664
    %v813 = vpop.f32.mrb[0].mxu0
    %v814 = vadd.f32 %v604, %v813
    %v815 = vpop.f32.mrb[0].mxu0
    %v816 = vadd.f32 %v606, %v815
    %817 = vmatprep.mubr.f32.mxu0 0.0
    %818 = vmatmul.mubr.f32.gmra.mrb[0].mxu0 %v667
    %v819 = vpop.f32.mrb[0].mxu0
    %v820 = vadd.f32 %v610, %v819
    %v821 = vpop.f32.mrb[0].mxu0
    %v822 = vadd.f32 %v612, %v821
    %823 = vmatprep.mubr.f32.mxu0 0.0
    %824 = vmatmul.mubr.f32.gmra.mrb[0].mxu0 %v670
    %v825 = vpop.f32.mrb[0].mxu0
    %v826 = vadd.f32 %v616, %v825
    %v827 = vpop.f32.mrb[0].mxu0
    %v828 = vadd.f32 %v618, %v827
    %829 = vmatprep.mubr.f32.mxu0 0.0
    %830 = vmatmul.mubr.f32.gmra.mrb[0].mxu0 %v673
    %v831 = vpop.f32.mrb[0].mxu0
    %v832 = vadd.f32 %v622, %v831
    %v833 = vpop.f32.mrb[0].mxu0
    %v834 = vadd.f32 %v624, %v833
    %835 = vdwg.mxu0
    %v836 = vld [vmem:[%s6] sm:$0x3]
    %v838 = vlaneseq
    %v839 = vshrl.u32 %v838, 7
    %v840 = vsub.s32 0, %v839
    %v841 = vrot.slane %v836, %v840
    %v842 = vlaneseq
    %v843 = vshrl.u32 %v842, 7
    %v844 = vsub.s32 1, %v843
    %v845 = vrot.slane %v836, %v844
    %v848 = vadd.f32 %v742, %v841
    %v849 = vadd.f32 %v744, %v845
    %v850 = vadd.f32 %v748, %v841
    %v851 = vadd.f32 %v750, %v845
    %v852 = vadd.f32 %v754, %v841
    %v853 = vadd.f32 %v756, %v845
    %v854 = vadd.f32 %v760, %v841
    %v855 = vadd.f32 %v762, %v845
    %v856 = vadd.f32 %v766, %v841
    %v857 = vadd.f32 %v768, %v845
    %v858 = vadd.f32 %v772, %v841
    %v859 = vadd.f32 %v774, %v845
    %v860 = vadd.f32 %v778, %v841
    %v861 = vadd.f32 %v780, %v845
    %v862 = vadd.f32 %v784, %v841
    %v863 = vadd.f32 %v786, %v845
    %v864 = vadd.f32 %v790, %v841
    %v865 = vadd.f32 %v792, %v845
    %v866 = vadd.f32 %v796, %v841
    %v867 = vadd.f32 %v798, %v845
    %v868 = vadd.f32 %v802, %v841
    %v869 = vadd.f32 %v804, %v845
    %v870 = vadd.f32 %v808, %v841
    %v871 = vadd.f32 %v810, %v845
    %v872 = vadd.f32 %v814, %v841
    %v873 = vadd.f32 %v816, %v845
    %v874 = vadd.f32 %v820, %v841
    %v875 = vadd.f32 %v822, %v845
    %v876 = vadd.f32 %v826, %v841
    %v877 = vadd.f32 %v828, %v845
    %v878 = vadd.f32 %v832, %v841
    %v879 = vadd.f32 %v834, %v845
    %vm880 = vcmp.gt.f32.partialorder %v848, 20.0
    %vm881 = vcmp.gt.f32.partialorder %v849, 20.0
    %vm882 = vcmp.gt.f32.partialorder %v850, 20.0
    %vm883 = vcmp.gt.f32.partialorder %v851, 20.0
    %vm884 = vcmp.gt.f32.partialorder %v852, 20.0
    %vm885 = vcmp.gt.f32.partialorder %v853, 20.0
    %vm886 = vcmp.gt.f32.partialorder %v854, 20.0
    %vm887 = vcmp.gt.f32.partialorder %v855, 20.0
    %vm888 = vcmp.gt.f32.partialorder %v856, 20.0
    %vm889 = vcmp.gt.f32.partialorder %v857, 20.0
    %vm890 = vcmp.gt.f32.partialorder %v858, 20.0
    %vm891 = vcmp.gt.f32.partialorder %v859, 20.0
    %vm892 = vcmp.gt.f32.partialorder %v860, 20.0
    %vm893 = vcmp.gt.f32.partialorder %v861, 20.0
    %vm894 = vcmp.gt.f32.partialorder %v862, 20.0
    %vm895 = vcmp.gt.f32.partialorder %v863, 20.0
    %vm896 = vcmp.gt.f32.partialorder %v864, 20.0
    %vm897 = vcmp.gt.f32.partialorder %v865, 20.0
    %vm898 = vcmp.gt.f32.partialorder %v866, 20.0
    %vm899 = vcmp.gt.f32.partialorder %v867, 20.0
    %vm900 = vcmp.gt.f32.partialorder %v868, 20.0
    %vm901 = vcmp.gt.f32.partialorder %v869, 20.0
    %vm902 = vcmp.gt.f32.partialorder %v870, 20.0
    %vm903 = vcmp.gt.f32.partialorder %v871, 20.0
    %vm904 = vcmp.gt.f32.partialorder %v872, 20.0
    %vm905 = vcmp.gt.f32.partialorder %v873, 20.0
    %vm906 = vcmp.gt.f32.partialorder %v874, 20.0
    %vm907 = vcmp.gt.f32.partialorder %v875, 20.0
    %vm908 = vcmp.gt.f32.partialorder %v876, 20.0
    %vm909 = vcmp.gt.f32.partialorder %v877, 20.0
    %vm910 = vcmp.gt.f32.partialorder %v878, 20.0
    %vm911 = vcmp.gt.f32.partialorder %v879, 20.0
    %v912 = vmin.f32 %v848, 20.0
    %v913 = vmin.f32 %v849, 20.0
    %v914 = vmin.f32 %v850, 20.0
    %v915 = vmin.f32 %v851, 20.0
    %v916 = vmin.f32 %v852, 20.0
    %v917 = vmin.f32 %v853, 20.0
    %v918 = vmin.f32 %v854, 20.0
    %v919 = vmin.f32 %v855, 20.0
    %v920 = vmin.f32 %v856, 20.0
    %v921 = vmin.f32 %v857, 20.0
    %v922 = vmin.f32 %v858, 20.0
    %v923 = vmin.f32 %v859, 20.0
    %v924 = vmin.f32 %v860, 20.0
    %v925 = vmin.f32 %v861, 20.0
    %v926 = vmin.f32 %v862, 20.0
    %v927 = vmin.f32 %v863, 20.0
    %v928 = vmin.f32 %v864, 20.0
    %v929 = vmin.f32 %v865, 20.0
    %v930 = vmin.f32 %v866, 20.0
    %v931 = vmin.f32 %v867, 20.0
    %v932 = vmin.f32 %v868, 20.0
    %v933 = vmin.f32 %v869, 20.0
    %v934 = vmin.f32 %v870, 20.0
    %v935 = vmin.f32 %v871, 20.0
    %v936 = vmin.f32 %v872, 20.0
    %v937 = vmin.f32 %v873, 20.0
    %v938 = vmin.f32 %v874, 20.0
    %v939 = vmin.f32 %v875, 20.0
    %v940 = vmin.f32 %v876, 20.0
    %v941 = vmin.f32 %v877, 20.0
    %v942 = vmin.f32 %v878, 20.0
    %v943 = vmin.f32 %v879, 20.0
    %v944 = vmul.f32 %v912, 1.442695
    %v945 = vpow.pop %v944
    %v946 = vmul.f32 %v913, 1.442695
    %v947 = vpow.pop %v946
    %v948 = vmul.f32 %v914, 1.442695
    %v949 = vpow.pop %v948
    %v950 = vmul.f32 %v915, 1.442695
    %v951 = vpow.pop %v950
    %v952 = vmul.f32 %v916, 1.442695
    %v953 = vpow.pop %v952
    %v954 = vmul.f32 %v917, 1.442695
    %v955 = vpow.pop %v954
    %v956 = vmul.f32 %v918, 1.442695
    %v957 = vpow.pop %v956
    %v958 = vmul.f32 %v919, 1.442695
    %v959 = vpow.pop %v958
    %v960 = vmul.f32 %v920, 1.442695
    %v961 = vpow.pop %v960
    %v962 = vmul.f32 %v921, 1.442695
    %v963 = vpow.pop %v962
    %v964 = vmul.f32 %v922, 1.442695
    %v965 = vpow.pop %v964
    %v966 = vmul.f32 %v923, 1.442695
    %v967 = vpow.pop %v966
    %v968 = vmul.f32 %v924, 1.442695
    %v969 = vpow.pop %v968
    %v970 = vmul.f32 %v925, 1.442695
    %v971 = vpow.pop %v970
    %v972 = vmul.f32 %v926, 1.442695
    %v973 = vpow.pop %v972
    %v974 = vmul.f32 %v927, 1.442695
    %v975 = vpow.pop %v974
    %v976 = vmul.f32 %v928, 1.442695
    %v977 = vpow.pop %v976
    %v978 = vmul.f32 %v929, 1.442695
    %v979 = vpow.pop %v978
    %v980 = vmul.f32 %v930, 1.442695
    %v981 = vpow.pop %v980
    %v982 = vmul.f32 %v931, 1.442695
    %v983 = vpow.pop %v982
    %v984 = vmul.f32 %v932, 1.442695
    %v985 = vpow.pop %v984
    %v986 = vmul.f32 %v933, 1.442695
    %v987 = vpow.pop %v986
    %v988 = vmul.f32 %v934, 1.442695
    %v989 = vpow.pop %v988
    %v990 = vmul.f32 %v935, 1.442695
    %v991 = vpow.pop %v990
    %v992 = vmul.f32 %v936, 1.442695
    %v993 = vpow.pop %v992
    %v994 = vmul.f32 %v937, 1.442695
    %v995 = vpow.pop %v994
    %v996 = vmul.f32 %v938, 1.442695
    %v997 = vpow.pop %v996
    %v998 = vmul.f32 %v939, 1.442695
    %v999 = vpow.pop %v998
    %v1000 = vmul.f32 %v940, 1.442695
    %v1001 = vpow.pop %v1000
    %v1002 = vmul.f32 %v941, 1.442695
    %v1003 = vpow.pop %v1002
    %v1004 = vmul.f32 %v942, 1.442695
    %v1005 = vpow.pop %v1004
    %v1006 = vmul.f32 %v943, 1.442695
    %v1007 = vpow.pop %v1006
    %v1008 = vadd.f32 %v945, 1.0
    %v1009 = vlog2.pop %v1008
    %v1010 = vmul.f32 %v1009, 0.6931472
    %v1011 = vmul.f32 -0.5, %v945
    %v1012 = vadd.f32 %v1011, 1.0
    %v1013 = vmul.f32 %v1012, %v945
    %v1014 = vand.u32 2147483647, %v945
    %vm1015 = vcmp.lt.f32.partialorder %v1014, 0.0004427343
    %v1016 = vsel %vm1015, %v1013, %v1010
    %v1017 = vadd.f32 %v947, 1.0
    %v1018 = vlog2.pop %v1017
    %v1019 = vmul.f32 %v1018, 0.6931472
    %v1020 = vmul.f32 -0.5, %v947
    %v1021 = vadd.f32 %v1020, 1.0
    %v1022 = vmul.f32 %v1021, %v947
    %v1023 = vand.u32 2147483647, %v947
    %vm1024 = vcmp.lt.f32.partialorder %v1023, 0.0004427343
    %v1025 = vsel %vm1024, %v1022, %v1019
    %v1026 = vadd.f32 %v949, 1.0
    %v1027 = vlog2.pop %v1026
    %v1028 = vmul.f32 %v1027, 0.6931472
    %v1029 = vmul.f32 -0.5, %v949
    %v1030 = vadd.f32 %v1029, 1.0
    %v1031 = vmul.f32 %v1030, %v949
    %v1032 = vand.u32 2147483647, %v949
    %vm1033 = vcmp.lt.f32.partialorder %v1032, 0.0004427343
    %v1034 = vsel %vm1033, %v1031, %v1028
    %v1035 = vadd.f32 %v951, 1.0
    %v1036 = vlog2.pop %v1035
    %v1037 = vmul.f32 %v1036, 0.6931472
    %v1038 = vmul.f32 -0.5, %v951
    %v1039 = vadd.f32 %v1038, 1.0
    %v1040 = vmul.f32 %v1039, %v951
    %v1041 = vand.u32 2147483647, %v951
    %vm1042 = vcmp.lt.f32.partialorder %v1041, 0.0004427343
    %v1043 = vsel %vm1042, %v1040, %v1037
    %v1044 = vadd.f32 %v953, 1.0
    %v1045 = vlog2.pop %v1044
    %v1046 = vmul.f32 %v1045, 0.6931472
    %v1047 = vmul.f32 -0.5, %v953
    %v1048 = vadd.f32 %v1047, 1.0
    %v1049 = vmul.f32 %v1048, %v953
    %v1050 = vand.u32 2147483647, %v953
    %vm1051 = vcmp.lt.f32.partialorder %v1050, 0.0004427343
    %v1052 = vsel %vm1051, %v1049, %v1046
    %v1053 = vadd.f32 %v955, 1.0
    %v1054 = vlog2.pop %v1053
    %v1055 = vmul.f32 %v1054, 0.6931472
    %v1056 = vmul.f32 -0.5, %v955
    %v1057 = vadd.f32 %v1056, 1.0
    %v1058 = vmul.f32 %v1057, %v955
    %v1059 = vand.u32 2147483647, %v955
    %vm1060 = vcmp.lt.f32.partialorder %v1059, 0.0004427343
    %v1061 = vsel %vm1060, %v1058, %v1055
    %v1062 = vadd.f32 %v957, 1.0
    %v1063 = vlog2.pop %v1062
    %v1064 = vmul.f32 %v1063, 0.6931472
    %v1065 = vmul.f32 -0.5, %v957
    %v1066 = vadd.f32 %v1065, 1.0
    %v1067 = vmul.f32 %v1066, %v957
    %v1068 = vand.u32 2147483647, %v957
    %vm1069 = vcmp.lt.f32.partialorder %v1068, 0.0004427343
    %v1070 = vsel %vm1069, %v1067, %v1064
    %v1071 = vadd.f32 %v959, 1.0
    %v1072 = vlog2.pop %v1071
    %v1073 = vmul.f32 %v1072, 0.6931472
    %v1074 = vmul.f32 -0.5, %v959
    %v1075 = vadd.f32 %v1074, 1.0
    %v1076 = vmul.f32 %v1075, %v959
    %v1077 = vand.u32 2147483647, %v959
    %vm1078 = vcmp.lt.f32.partialorder %v1077, 0.0004427343
    %v1079 = vsel %vm1078, %v1076, %v1073
    %v1080 = vadd.f32 %v961, 1.0
    %v1081 = vlog2.pop %v1080
    %v1082 = vmul.f32 %v1081, 0.6931472
    %v1083 = vmul.f32 -0.5, %v961
    %v1084 = vadd.f32 %v1083, 1.0
    %v1085 = vmul.f32 %v1084, %v961
    %v1086 = vand.u32 2147483647, %v961
    %vm1087 = vcmp.lt.f32.partialorder %v1086, 0.0004427343
    %v1088 = vsel %vm1087, %v1085, %v1082
    %v1089 = vadd.f32 %v963, 1.0
    %v1090 = vlog2.pop %v1089
    %v1091 = vmul.f32 %v1090, 0.6931472
    %v1092 = vmul.f32 -0.5, %v963
    %v1093 = vadd.f32 %v1092, 1.0
    %v1094 = vmul.f32 %v1093, %v963
    %v1095 = vand.u32 2147483647, %v963
    %vm1096 = vcmp.lt.f32.partialorder %v1095, 0.0004427343
    %v1097 = vsel %vm1096, %v1094, %v1091
    %v1098 = vadd.f32 %v965, 1.0
    %v1099 = vlog2.pop %v1098
    %v1100 = vmul.f32 %v1099, 0.6931472
    %v1101 = vmul.f32 -0.5, %v965
    %v1102 = vadd.f32 %v1101, 1.0
    %v1103 = vmul.f32 %v1102, %v965
    %v1104 = vand.u32 2147483647, %v965
    %vm1105 = vcmp.lt.f32.partialorder %v1104, 0.0004427343
    %v1106 = vsel %vm1105, %v1103, %v1100
    %v1107 = vadd.f32 %v967, 1.0
    %v1108 = vlog2.pop %v1107
    %v1109 = vmul.f32 %v1108, 0.6931472
    %v1110 = vmul.f32 -0.5, %v967
    %v1111 = vadd.f32 %v1110, 1.0
    %v1112 = vmul.f32 %v1111, %v967
    %v1113 = vand.u32 2147483647, %v967
    %vm1114 = vcmp.lt.f32.partialorder %v1113, 0.0004427343
    %v1115 = vsel %vm1114, %v1112, %v1109
    %v1116 = vadd.f32 %v969, 1.0
    %v1117 = vlog2.pop %v1116
    %v1118 = vmul.f32 %v1117, 0.6931472
    %v1119 = vmul.f32 -0.5, %v969
    %v1120 = vadd.f32 %v1119, 1.0
    %v1121 = vmul.f32 %v1120, %v969
    %v1122 = vand.u32 2147483647, %v969
    %vm1123 = vcmp.lt.f32.partialorder %v1122, 0.0004427343
    %v1124 = vsel %vm1123, %v1121, %v1118
    %v1125 = vadd.f32 %v971, 1.0
    %v1126 = vlog2.pop %v1125
    %v1127 = vmul.f32 %v1126, 0.6931472
    %v1128 = vmul.f32 -0.5, %v971
    %v1129 = vadd.f32 %v1128, 1.0
    %v1130 = vmul.f32 %v1129, %v971
    %v1131 = vand.u32 2147483647, %v971
    %vm1132 = vcmp.lt.f32.partialorder %v1131, 0.0004427343
    %v1133 = vsel %vm1132, %v1130, %v1127
    %v1134 = vadd.f32 %v973, 1.0
    %v1135 = vlog2.pop %v1134
    %v1136 = vmul.f32 %v1135, 0.6931472
    %v1137 = vmul.f32 -0.5, %v973
    %v1138 = vadd.f32 %v1137, 1.0
    %v1139 = vmul.f32 %v1138, %v973
    %v1140 = vand.u32 2147483647, %v973
    %vm1141 = vcmp.lt.f32.partialorder %v1140, 0.0004427343
    %v1142 = vsel %vm1141, %v1139, %v1136
    %v1143 = vadd.f32 %v975, 1.0
    %v1144 = vlog2.pop %v1143
    %v1145 = vmul.f32 %v1144, 0.6931472
    %v1146 = vmul.f32 -0.5, %v975
    %v1147 = vadd.f32 %v1146, 1.0
    %v1148 = vmul.f32 %v1147, %v975
    %v1149 = vand.u32 2147483647, %v975
    %vm1150 = vcmp.lt.f32.partialorder %v1149, 0.0004427343
    %v1151 = vsel %vm1150, %v1148, %v1145
    %v1152 = vadd.f32 %v977, 1.0
    %v1153 = vlog2.pop %v1152
    %v1154 = vmul.f32 %v1153, 0.6931472
    %v1155 = vmul.f32 -0.5, %v977
    %v1156 = vadd.f32 %v1155, 1.0
    %v1157 = vmul.f32 %v1156, %v977
    %v1158 = vand.u32 2147483647, %v977
    %vm1159 = vcmp.lt.f32.partialorder %v1158, 0.0004427343
    %v1160 = vsel %vm1159, %v1157, %v1154
    %v1161 = vadd.f32 %v979, 1.0
    %v1162 = vlog2.pop %v1161
    %v1163 = vmul.f32 %v1162, 0.6931472
    %v1164 = vmul.f32 -0.5, %v979
    %v1165 = vadd.f32 %v1164, 1.0
    %v1166 = vmul.f32 %v1165, %v979
    %v1167 = vand.u32 2147483647, %v979
    %vm1168 = vcmp.lt.f32.partialorder %v1167, 0.0004427343
    %v1169 = vsel %vm1168, %v1166, %v1163
    %v1170 = vadd.f32 %v981, 1.0
    %v1171 = vlog2.pop %v1170
    %v1172 = vmul.f32 %v1171, 0.6931472
    %v1173 = vmul.f32 -0.5, %v981
    %v1174 = vadd.f32 %v1173, 1.0
    %v1175 = vmul.f32 %v1174, %v981
    %v1176 = vand.u32 2147483647, %v981
    %vm1177 = vcmp.lt.f32.partialorder %v1176, 0.0004427343
    %v1178 = vsel %vm1177, %v1175, %v1172
    %v1179 = vadd.f32 %v983, 1.0
    %v1180 = vlog2.pop %v1179
    %v1181 = vmul.f32 %v1180, 0.6931472
    %v1182 = vmul.f32 -0.5, %v983
    %v1183 = vadd.f32 %v1182, 1.0
    %v1184 = vmul.f32 %v1183, %v983
    %v1185 = vand.u32 2147483647, %v983
    %vm1186 = vcmp.lt.f32.partialorder %v1185, 0.0004427343
    %v1187 = vsel %vm1186, %v1184, %v1181
    %v1188 = vadd.f32 %v985, 1.0
    %v1189 = vlog2.pop %v1188
    %v1190 = vmul.f32 %v1189, 0.6931472
    %v1191 = vmul.f32 -0.5, %v985
    %v1192 = vadd.f32 %v1191, 1.0
    %v1193 = vmul.f32 %v1192, %v985
    %v1194 = vand.u32 2147483647, %v985
    %vm1195 = vcmp.lt.f32.partialorder %v1194, 0.0004427343
    %v1196 = vsel %vm1195, %v1193, %v1190
    %v1197 = vadd.f32 %v987, 1.0
    %v1198 = vlog2.pop %v1197
    %v1199 = vmul.f32 %v1198, 0.6931472
    %v1200 = vmul.f32 -0.5, %v987
    %v1201 = vadd.f32 %v1200, 1.0
    %v1202 = vmul.f32 %v1201, %v987
    %v1203 = vand.u32 2147483647, %v987
    %vm1204 = vcmp.lt.f32.partialorder %v1203, 0.0004427343
    %v1205 = vsel %vm1204, %v1202, %v1199
    %v1206 = vadd.f32 %v989, 1.0
    %v1207 = vlog2.pop %v1206
    %v1208 = vmul.f32 %v1207, 0.6931472
    %v1209 = vmul.f32 -0.5, %v989
    %v1210 = vadd.f32 %v1209, 1.0
    %v1211 = vmul.f32 %v1210, %v989
    %v1212 = vand.u32 2147483647, %v989
    %vm1213 = vcmp.lt.f32.partialorder %v1212, 0.0004427343
    %v1214 = vsel %vm1213, %v1211, %v1208
    %v1215 = vadd.f32 %v991, 1.0
    %v1216 = vlog2.pop %v1215
    %v1217 = vmul.f32 %v1216, 0.6931472
    %v1218 = vmul.f32 -0.5, %v991
    %v1219 = vadd.f32 %v1218, 1.0
    %v1220 = vmul.f32 %v1219, %v991
    %v1221 = vand.u32 2147483647, %v991
    %vm1222 = vcmp.lt.f32.partialorder %v1221, 0.0004427343
    %v1223 = vsel %vm1222, %v1220, %v1217
    %v1224 = vadd.f32 %v993, 1.0
    %v1225 = vlog2.pop %v1224
    %v1226 = vmul.f32 %v1225, 0.6931472
    %v1227 = vmul.f32 -0.5, %v993
    %v1228 = vadd.f32 %v1227, 1.0
    %v1229 = vmul.f32 %v1228, %v993
    %v1230 = vand.u32 2147483647, %v993
    %vm1231 = vcmp.lt.f32.partialorder %v1230, 0.0004427343
    %v1232 = vsel %vm1231, %v1229, %v1226
    %v1233 = vadd.f32 %v995, 1.0
    %v1234 = vlog2.pop %v1233
    %v1235 = vmul.f32 %v1234, 0.6931472
    %v1236 = vmul.f32 -0.5, %v995
    %v1237 = vadd.f32 %v1236, 1.0
    %v1238 = vmul.f32 %v1237, %v995
    %v1239 = vand.u32 2147483647, %v995
    %vm1240 = vcmp.lt.f32.partialorder %v1239, 0.0004427343
    %v1241 = vsel %vm1240, %v1238, %v1235
    %v1242 = vadd.f32 %v997, 1.0
    %v1243 = vlog2.pop %v1242
    %v1244 = vmul.f32 %v1243, 0.6931472
    %v1245 = vmul.f32 -0.5, %v997
    %v1246 = vadd.f32 %v1245, 1.0
    %v1247 = vmul.f32 %v1246, %v997
    %v1248 = vand.u32 2147483647, %v997
    %vm1249 = vcmp.lt.f32.partialorder %v1248, 0.0004427343
    %v1250 = vsel %vm1249, %v1247, %v1244
    %v1251 = vadd.f32 %v999, 1.0
    %v1252 = vlog2.pop %v1251
    %v1253 = vmul.f32 %v1252, 0.6931472
    %v1254 = vmul.f32 -0.5, %v999
    %v1255 = vadd.f32 %v1254, 1.0
    %v1256 = vmul.f32 %v1255, %v999
    %v1257 = vand.u32 2147483647, %v999
    %vm1258 = vcmp.lt.f32.partialorder %v1257, 0.0004427343
    %v1259 = vsel %vm1258, %v1256, %v1253
    %v1260 = vadd.f32 %v1001, 1.0
    %v1261 = vlog2.pop %v1260
    %v1262 = vmul.f32 %v1261, 0.6931472
    %v1263 = vmul.f32 -0.5, %v1001
    %v1264 = vadd.f32 %v1263, 1.0
    %v1265 = vmul.f32 %v1264, %v1001
    %v1266 = vand.u32 2147483647, %v1001
    %vm1267 = vcmp.lt.f32.partialorder %v1266, 0.0004427343
    %v1268 = vsel %vm1267, %v1265, %v1262
    %v1269 = vadd.f32 %v1003, 1.0
    %v1270 = vlog2.pop %v1269
    %v1271 = vmul.f32 %v1270, 0.6931472
    %v1272 = vmul.f32 -0.5, %v1003
    %v1273 = vadd.f32 %v1272, 1.0
    %v1274 = vmul.f32 %v1273, %v1003
    %v1275 = vand.u32 2147483647, %v1003
    %vm1276 = vcmp.lt.f32.partialorder %v1275, 0.0004427343
    %v1277 = vsel %vm1276, %v1274, %v1271
    %v1278 = vadd.f32 %v1005, 1.0
    %v1279 = vlog2.pop %v1278
    %v1280 = vmul.f32 %v1279, 0.6931472
    %v1281 = vmul.f32 -0.5, %v1005
    %v1282 = vadd.f32 %v1281, 1.0
    %v1283 = vmul.f32 %v1282, %v1005
    %v1284 = vand.u32 2147483647, %v1005
    %vm1285 = vcmp.lt.f32.partialorder %v1284, 0.0004427343
    %v1286 = vsel %vm1285, %v1283, %v1280
    %v1287 = vadd.f32 %v1007, 1.0
    %v1288 = vlog2.pop %v1287
    %v1289 = vmul.f32 %v1288, 0.6931472
    %v1290 = vmul.f32 -0.5, %v1007
    %v1291 = vadd.f32 %v1290, 1.0
    %v1292 = vmul.f32 %v1291, %v1007
    %v1293 = vand.u32 2147483647, %v1007
    %vm1294 = vcmp.lt.f32.partialorder %v1293, 0.0004427343
    %v1295 = vsel %vm1294, %v1292, %v1289
    %v1296 = vsel %vm880, %v848, %v1016
    %v1297 = vsel %vm881, %v849, %v1025
    %v1298 = vsel %vm882, %v850, %v1034
    %v1299 = vsel %vm883, %v851, %v1043
    %v1300 = vsel %vm884, %v852, %v1052
    %v1301 = vsel %vm885, %v853, %v1061
    %v1302 = vsel %vm886, %v854, %v1070
    %v1303 = vsel %vm887, %v855, %v1079
    %v1304 = vsel %vm888, %v856, %v1088
    %v1305 = vsel %vm889, %v857, %v1097
    %v1306 = vsel %vm890, %v858, %v1106
    %v1307 = vsel %vm891, %v859, %v1115
    %v1308 = vsel %vm892, %v860, %v1124
    %v1309 = vsel %vm893, %v861, %v1133
    %v1310 = vsel %vm894, %v862, %v1142
    %v1311 = vsel %vm895, %v863, %v1151
    %v1312 = vsel %vm896, %v864, %v1160
    %v1313 = vsel %vm897, %v865, %v1169
    %v1314 = vsel %vm898, %v866, %v1178
    %v1315 = vsel %vm899, %v867, %v1187
    %v1316 = vsel %vm900, %v868, %v1196
    %v1317 = vsel %vm901, %v869, %v1205
    %v1318 = vsel %vm902, %v870, %v1214
    %v1319 = vsel %vm903, %v871, %v1223
    %v1320 = vsel %vm904, %v872, %v1232
    %v1321 = vsel %vm905, %v873, %v1241
    %v1322 = vsel %vm906, %v874, %v1250
    %v1323 = vsel %vm907, %v875, %v1259
    %v1324 = vsel %vm908, %v876, %v1268
    %v1325 = vsel %vm909, %v877, %v1277
    %v1326 = vsel %vm910, %v878, %v1286
    %v1327 = vsel %vm911, %v879, %v1295
    %v1328 = vsub.f32 %v1296, 0.6931472
    %v1329 = vsub.f32 %v1297, 0.6931472
    %v1330 = vsub.f32 %v1298, 0.6931472
    %v1331 = vsub.f32 %v1299, 0.6931472
    %v1332 = vsub.f32 %v1300, 0.6931472
    %v1333 = vsub.f32 %v1301, 0.6931472
    %v1334 = vsub.f32 %v1302, 0.6931472
    %v1335 = vsub.f32 %v1303, 0.6931472
    %v1336 = vsub.f32 %v1304, 0.6931472
    %v1337 = vsub.f32 %v1305, 0.6931472
    %v1338 = vsub.f32 %v1306, 0.6931472
    %v1339 = vsub.f32 %v1307, 0.6931472
    %v1340 = vsub.f32 %v1308, 0.6931472
    %v1341 = vsub.f32 %v1309, 0.6931472
    %v1342 = vsub.f32 %v1310, 0.6931472
    %v1343 = vsub.f32 %v1311, 0.6931472
    %v1344 = vsub.f32 %v1312, 0.6931472
    %v1345 = vsub.f32 %v1313, 0.6931472
    %v1346 = vsub.f32 %v1314, 0.6931472
    %v1347 = vsub.f32 %v1315, 0.6931472
    %v1348 = vsub.f32 %v1316, 0.6931472
    %v1349 = vsub.f32 %v1317, 0.6931472
    %v1350 = vsub.f32 %v1318, 0.6931472
    %v1351 = vsub.f32 %v1319, 0.6931472
    %v1352 = vsub.f32 %v1320, 0.6931472
    %v1353 = vsub.f32 %v1321, 0.6931472
    %v1354 = vsub.f32 %v1322, 0.6931472
    %v1355 = vsub.f32 %v1323, 0.6931472
    %v1356 = vsub.f32 %v1324, 0.6931472
    %v1357 = vsub.f32 %v1325, 0.6931472
    %v1358 = vsub.f32 %v1326, 0.6931472
    %v1359 = vsub.f32 %v1327, 0.6931472
    %v1360 = vld [vmem:[#allocation6] sm:$0xff]
    %v1361 = vld [vmem:[#allocation6 + $0x8] sm:$0xff]
    %v1362 = vld [vmem:[#allocation6 + $0x10] sm:$0xff]
    %v1363 = vld [vmem:[#allocation6 + $0x18] sm:$0xff]
    %v1364 = vld [vmem:[#allocation6 + $0x20] sm:$0xff]
    %v1365 = vld [vmem:[#allocation6 + $0x28] sm:$0xff]
    %v1366 = vld [vmem:[#allocation6 + $0x30] sm:$0xff]
    %v1367 = vld [vmem:[#allocation6 + $0x38] sm:$0xff]
    %v1368 = vld [vmem:[#allocation6 + $0x40] sm:$0xff]
    %v1369 = vld [vmem:[#allocation6 + $0x48] sm:$0xff]
    %v1370 = vld [vmem:[#allocation6 + $0x50] sm:$0xff]
    %v1371 = vld [vmem:[#allocation6 + $0x58] sm:$0xff]
    %v1372 = vld [vmem:[#allocation6 + $0x60] sm:$0xff]
    %v1373 = vld [vmem:[#allocation6 + $0x68] sm:$0xff]
    %v1374 = vld [vmem:[#allocation6 + $0x70] sm:$0xff]
    %v1375 = vld [vmem:[#allocation6 + $0x78] sm:$0xff]
    %v1376 = vld [vmem:[#allocation6 + $0x80] sm:$0xff]
    %v1377 = vld [vmem:[#allocation6 + $0x88] sm:$0xff]
    %v1378 = vld [vmem:[#allocation6 + $0x90] sm:$0xff]
    %v1379 = vld [vmem:[#allocation6 + $0x98] sm:$0xff]
    %v1380 = vld [vmem:[#allocation6 + $0xa0] sm:$0xff]
    %v1381 = vld [vmem:[#allocation6 + $0xa8] sm:$0xff]
    %v1382 = vld [vmem:[#allocation6 + $0xb0] sm:$0xff]
    %v1383 = vld [vmem:[#allocation6 + $0xb8] sm:$0xff]
    %v1384 = vld [vmem:[#allocation6 + $0xc0] sm:$0xff]
    %v1385 = vld [vmem:[#allocation6 + $0xc8] sm:$0xff]
    %v1386 = vld [vmem:[#allocation6 + $0xd0] sm:$0xff]
    %v1387 = vld [vmem:[#allocation6 + $0xd8] sm:$0xff]
    %v1388 = vld [vmem:[#allocation6 + $0xe0] sm:$0xff]
    %v1389 = vld [vmem:[#allocation6 + $0xe8] sm:$0xff]
    %v1390 = vld [vmem:[#allocation6 + $0xf0] sm:$0xff]
    %v1391 = vld [vmem:[#allocation6 + $0xf8] sm:$0xff]
    %v1392 = vld [vmem:[#allocation6 + $0x100] sm:$0xff]
    %v1393 = vld [vmem:[#allocation6 + $0x108] sm:$0xff]
    %v1394 = vld [vmem:[#allocation6 + $0x110] sm:$0xff]
    %v1395 = vld [vmem:[#allocation6 + $0x118] sm:$0xff]
    %v1396 = vld [vmem:[#allocation6 + $0x120] sm:$0xff]
    %v1397 = vld [vmem:[#allocation6 + $0x128] sm:$0xff]
    %v1398 = vld [vmem:[#allocation6 + $0x130] sm:$0xff]
    %v1399 = vld [vmem:[#allocation6 + $0x138] sm:$0xff]
    %v1400 = vld [vmem:[#allocation6 + $0x140] sm:$0xff]
    %v1401 = vld [vmem:[#allocation6 + $0x148] sm:$0xff]
    %v1402 = vld [vmem:[#allocation6 + $0x150] sm:$0xff]
    %v1403 = vld [vmem:[#allocation6 + $0x158] sm:$0xff]
    %v1404 = vld [vmem:[#allocation6 + $0x160] sm:$0xff]
    %v1405 = vld [vmem:[#allocation6 + $0x168] sm:$0xff]
    %v1406 = vld [vmem:[#allocation6 + $0x170] sm:$0xff]
    %v1407 = vld [vmem:[#allocation6 + $0x178] sm:$0xff]
    %v1408 = vld [vmem:[#allocation6 + $0x180] sm:$0xff]
    %v1409 = vld [vmem:[#allocation6 + $0x188] sm:$0xff]
    %v1410 = vld [vmem:[#allocation6 + $0x190] sm:$0xff]
    %v1411 = vld [vmem:[#allocation6 + $0x198] sm:$0xff]
    %v1412 = vld [vmem:[#allocation6 + $0x1a0] sm:$0xff]
    %v1413 = vld [vmem:[#allocation6 + $0x1a8] sm:$0xff]
    %v1414 = vld [vmem:[#allocation6 + $0x1b0] sm:$0xff]
    %v1415 = vld [vmem:[#allocation6 + $0x1b8] sm:$0xff]
    %v1416 = vld [vmem:[#allocation6 + $0x1c0] sm:$0xff]
    %v1417 = vld [vmem:[#allocation6 + $0x1c8] sm:$0xff]
    %v1418 = vld [vmem:[#allocation6 + $0x1d0] sm:$0xff]
    %v1419 = vld [vmem:[#allocation6 + $0x1d8] sm:$0xff]
    %v1420 = vld [vmem:[#allocation6 + $0x1e0] sm:$0xff]
    %v1421 = vld [vmem:[#allocation6 + $0x1e8] sm:$0xff]
    %v1422 = vld [vmem:[#allocation6 + $0x1f0] sm:$0xff]
    %v1423 = vld [vmem:[#allocation6 + $0x1f8] sm:$0xff]
    %v1424 = vld [vmem:[%s8] sm:$0x3]
    %v1426 = vlaneseq
    %v1427 = vshrl.u32 %v1426, 7
    %v1428 = vsub.s32 0, %v1427
    %v1429 = vrot.slane %v1424, %v1428
    %v1430 = vlaneseq
    %v1431 = vshrl.u32 %v1430, 7
    %v1432 = vsub.s32 1, %v1431
    %v1433 = vrot.slane %v1424, %v1432
    %1436 = vmatprep.subr.mxu0 %v1361
    %1437 = vmatpush1.msra.mxu0 %v1360
    %1438 = vmatprep.subr.mxu0 %v1363
    %1439 = vmatpush1.msra.mxu0 %v1362
    %1440 = vmatprep.subr.mxu0 %v1365
    %1441 = vmatpush1.msra.mxu0 %v1364
    %1442 = vmatprep.subr.mxu0 %v1367
    %1443 = vmatpush1.msra.mxu0 %v1366
    %1444 = vmatprep.subr.mxu0 %v1369
    %1445 = vmatpush1.msra.mxu0 %v1368
    %1446 = vmatprep.subr.mxu0 %v1371
    %1447 = vmatpush1.msra.mxu0 %v1370
    %1448 = vmatprep.subr.mxu0 %v1373
    %1449 = vmatpush1.msra.mxu0 %v1372
    %1450 = vmatprep.subr.mxu0 %v1375
    %1451 = vmatpush1.msra.mxu0 %v1374
    %1452 = vmatprep.subr.mxu0 %v1377
    %1453 = vmatpush1.msra.mxu0 %v1376
    %1454 = vmatprep.subr.mxu0 %v1379
    %1455 = vmatpush1.msra.mxu0 %v1378
    %1456 = vmatprep.subr.mxu0 %v1381
    %1457 = vmatpush1.msra.mxu0 %v1380
    %1458 = vmatprep.subr.mxu0 %v1383
    %1459 = vmatpush1.msra.mxu0 %v1382
    %1460 = vmatprep.subr.mxu0 %v1385
    %1461 = vmatpush1.msra.mxu0 %v1384
    %1462 = vmatprep.subr.mxu0 %v1387
    %1463 = vmatpush1.msra.mxu0 %v1386
    %1464 = vmatprep.subr.mxu0 %v1389
    %1465 = vmatpush1.msra.mxu0 %v1388
    %1466 = vmatprep.subr.mxu0 %v1391
    %1467 = vmatpush1.msra.mxu0 %v1390
    %1468 = vmatprep.subr.mxu0 %v1393
    %1469 = vmatpush1.msra.mxu0 %v1392
    %1470 = vmatprep.subr.mxu0 %v1395
    %1471 = vmatpush1.msra.mxu0 %v1394
    %1472 = vmatprep.subr.mxu0 %v1397
    %1473 = vmatpush1.msra.mxu0 %v1396
    %1474 = vmatprep.subr.mxu0 %v1399
    %1475 = vmatpush1.msra.mxu0 %v1398
    %1476 = vmatprep.subr.mxu0 %v1401
    %1477 = vmatpush1.msra.mxu0 %v1400
    %1478 = vmatprep.subr.mxu0 %v1403
    %1479 = vmatpush1.msra.mxu0 %v1402
    %1480 = vmatprep.subr.mxu0 %v1405
    %1481 = vmatpush1.msra.mxu0 %v1404
    %1482 = vmatprep.subr.mxu0 %v1407
    %1483 = vmatpush1.msra.mxu0 %v1406
    %1484 = vmatprep.subr.mxu0 %v1409
    %1485 = vmatpush1.msra.mxu0 %v1408
    %1486 = vmatprep.subr.mxu0 %v1411
    %1487 = vmatpush1.msra.mxu0 %v1410
    %1488 = vmatprep.subr.mxu0 %v1413
    %1489 = vmatpush1.msra.mxu0 %v1412
    %1490 = vmatprep.subr.mxu0 %v1415
    %1491 = vmatpush1.msra.mxu0 %v1414
    %1492 = vmatprep.subr.mxu0 %v1417
    %1493 = vmatpush1.msra.mxu0 %v1416
    %1494 = vmatprep.subr.mxu0 %v1419
    %1495 = vmatpush1.msra.mxu0 %v1418
    %1496 = vmatprep.subr.mxu0 %v1421
    %1497 = vmatpush1.msra.mxu0 %v1420
    %1498 = vmatprep.subr.mxu0 %v1423
    %1499 = vmatpush1.msra.mxu0 %v1422
    %1500 = vmatprep.mubr.f32.mxu0 %v1329
    %1501 = vmatmul.mubr.f32.gmra.mrb[0].mxu0 %v1328
    %v1502 = vpop.f32.mrb[0].mxu0
    %v1503 = vadd.f32 %v1429, %v1502
    %v1504 = vpop.f32.mrb[0].mxu0
    %v1505 = vadd.f32 %v1433, %v1504
    %1506 = vmatprep.mubr.f32.mxu0 %v1331
    %1507 = vmatmul.mubr.f32.gmra.mrb[0].mxu0 %v1330
    %v1508 = vpop.f32.mrb[0].mxu0
    %v1509 = vadd.f32 %v1429, %v1508
    %v1510 = vpop.f32.mrb[0].mxu0
    %v1511 = vadd.f32 %v1433, %v1510
    %1512 = vmatprep.mubr.f32.mxu0 %v1333
    %1513 = vmatmul.mubr.f32.gmra.mrb[0].mxu0 %v1332
    %v1514 = vpop.f32.mrb[0].mxu0
    %v1515 = vadd.f32 %v1429, %v1514
    %v1516 = vpop.f32.mrb[0].mxu0
    %v1517 = vadd.f32 %v1433, %v1516
    %1518 = vmatprep.mubr.f32.mxu0 %v1335
    %1519 = vmatmul.mubr.f32.gmra.mrb[0].mxu0 %v1334
    %v1520 = vpop.f32.mrb[0].mxu0
    %v1521 = vadd.f32 %v1429, %v1520
    %v1522 = vpop.f32.mrb[0].mxu0
    %v1523 = vadd.f32 %v1433, %v1522
    %1524 = vmatprep.mubr.f32.mxu0 %v1337
    %1525 = vmatmul.mubr.f32.gmra.mrb[0].mxu0 %v1336
    %v1526 = vpop.f32.mrb[0].mxu0
    %v1527 = vadd.f32 %v1429, %v1526
    %v1528 = vpop.f32.mrb[0].mxu0
    %v1529 = vadd.f32 %v1433, %v1528
    %1530 = vmatprep.mubr.f32.mxu0 %v1339
    %1531 = vmatmul.mubr.f32.gmra.mrb[0].mxu0 %v1338
    %v1532 = vpop.f32.mrb[0].mxu0
    %v1533 = vadd.f32 %v1429, %v1532
    %v1534 = vpop.f32.mrb[0].mxu0
    %v1535 = vadd.f32 %v1433, %v1534
    %1536 = vmatprep.mubr.f32.mxu0 %v1341
    %1537 = vmatmul.mubr.f32.gmra.mrb[0].mxu0 %v1340
    %v1538 = vpop.f32.mrb[0].mxu0
    %v1539 = vadd.f32 %v1429, %v1538
    %v1540 = vpop.f32.mrb[0].mxu0
    %v1541 = vadd.f32 %v1433, %v1540
    %1542 = vmatprep.mubr.f32.mxu0 %v1343
    %1543 = vmatmul.mubr.f32.gmra.mrb[0].mxu0 %v1342
    %v1544 = vpop.f32.mrb[0].mxu0
    %v1545 = vadd.f32 %v1429, %v1544
    %v1546 = vpop.f32.mrb[0].mxu0
    %v1547 = vadd.f32 %v1433, %v1546
    %1548 = vmatprep.mubr.f32.mxu0 %v1345
    %1549 = vmatmul.mubr.f32.gmra.mrb[0].mxu0 %v1344
    %v1550 = vpop.f32.mrb[0].mxu0
    %v1551 = vadd.f32 %v1429, %v1550
    %v1552 = vpop.f32.mrb[0].mxu0
    %v1553 = vadd.f32 %v1433, %v1552
    %1554 = vmatprep.mubr.f32.mxu0 %v1347
    %1555 = vmatmul.mubr.f32.gmra.mrb[0].mxu0 %v1346
    %v1556 = vpop.f32.mrb[0].mxu0
    %v1557 = vadd.f32 %v1429, %v1556
    %v1558 = vpop.f32.mrb[0].mxu0
    %v1559 = vadd.f32 %v1433, %v1558
    %1560 = vmatprep.mubr.f32.mxu0 %v1349
    %1561 = vmatmul.mubr.f32.gmra.mrb[0].mxu0 %v1348
    %v1562 = vpop.f32.mrb[0].mxu0
    %v1563 = vadd.f32 %v1429, %v1562
    %v1564 = vpop.f32.mrb[0].mxu0
    %v1565 = vadd.f32 %v1433, %v1564
    %1566 = vmatprep.mubr.f32.mxu0 %v1351
    %1567 = vmatmul.mubr.f32.gmra.mrb[0].mxu0 %v1350
    %v1568 = vpop.f32.mrb[0].mxu0
    %v1569 = vadd.f32 %v1429, %v1568
    %v1570 = vpop.f32.mrb[0].mxu0
    %v1571 = vadd.f32 %v1433, %v1570
    %1572 = vmatprep.mubr.f32.mxu0 %v1353
    %1573 = vmatmul.mubr.f32.gmra.mrb[0].mxu0 %v1352
    %v1574 = vpop.f32.mrb[0].mxu0
    %v1575 = vadd.f32 %v1429, %v1574
    %v1576 = vpop.f32.mrb[0].mxu0
    %v1577 = vadd.f32 %v1433, %v1576
    %1578 = vmatprep.mubr.f32.mxu0 %v1355
    %1579 = vmatmul.mubr.f32.gmra.mrb[0].mxu0 %v1354
    %v1580 = vpop.f32.mrb[0].mxu0
    %v1581 = vadd.f32 %v1429, %v1580
    %v1582 = vpop.f32.mrb[0].mxu0
    %v1583 = vadd.f32 %v1433, %v1582
    %1584 = vmatprep.mubr.f32.mxu0 %v1357
    %1585 = vmatmul.mubr.f32.gmra.mrb[0].mxu0 %v1356
    %v1586 = vpop.f32.mrb[0].mxu0
    %v1587 = vadd.f32 %v1429, %v1586
    %v1588 = vpop.f32.mrb[0].mxu0
    %v1589 = vadd.f32 %v1433, %v1588
    %1590 = vmatprep.mubr.f32.mxu0 %v1359
    %1591 = vmatmul.mubr.f32.gmra.mrb[0].mxu0 %v1358
    %v1592 = vpop.f32.mrb[0].mxu0
    %v1593 = vadd.f32 %v1429, %v1592
    %v1594 = vpop.f32.mrb[0].mxu0
    %v1595 = vadd.f32 %v1433, %v1594
    %1596 = vdwg.mxu0
    %v1597 = vmul.f32 %v1503, %v1505
    %v1598 = vmul.f32 %v1509, %v1511
    %v1599 = vmul.f32 %v1515, %v1517
    %v1600 = vmul.f32 %v1521, %v1523
    %v1601 = vmul.f32 %v1527, %v1529
    %v1602 = vmul.f32 %v1533, %v1535
    %v1603 = vmul.f32 %v1539, %v1541
    %v1604 = vmul.f32 %v1545, %v1547
    %v1605 = vmul.f32 %v1551, %v1553
    %v1606 = vmul.f32 %v1557, %v1559
    %v1607 = vmul.f32 %v1563, %v1565
    %v1608 = vmul.f32 %v1569, %v1571
    %v1609 = vmul.f32 %v1575, %v1577
    %v1610 = vmul.f32 %v1581, %v1583
    %v1611 = vmul.f32 %v1587, %v1589
    %v1612 = vmul.f32 %v1593, %v1595
    %v1613 = vlaneseq
    %v1614 = vshrl.u32 %v1613, 7
    %v1615 = vlaneseq
    %v1616 = vshrl.u32 %v1615, 7
    %v1617 = vsub.s32 0, %v1616
    %v1618 = vrot.slane %v119, %v1617
    %vm1619 = vcmp.eq.s32.totalorder %v1614, %v1618
    %v1620 = vsel %vm1619, 1, 0
    %v1621 = vcvt.s32.f32 %v1620
    %v1622 = vld [vmem:[#allocation2] sm:$0xff]
    %1623 = vmatprep.subr.mxu0 0.0
    %1624 = vmatpush1.msra.mxu0 %v1597
    %1625 = vmatprep.subr.mxu0 0.0
    %1626 = vmatpush1.msra.mxu0 %v1598
    %1627 = vmatprep.subr.mxu0 0.0
    %1628 = vmatpush1.msra.mxu0 %v1599
    %1629 = vmatprep.subr.mxu0 0.0
    %1630 = vmatpush1.msra.mxu0 %v1600
    %1631 = vmatprep.subr.mxu0 0.0
    %1632 = vmatpush1.msra.mxu0 %v1601
    %1633 = vmatprep.subr.mxu0 0.0
    %1634 = vmatpush1.msra.mxu0 %v1602
    %1635 = vmatprep.subr.mxu0 0.0
    %1636 = vmatpush1.msra.mxu0 %v1603
    %1637 = vmatprep.subr.mxu0 0.0
    %1638 = vmatpush1.msra.mxu0 %v1604
    %1639 = vmatprep.subr.mxu0 0.0
    %1640 = vmatpush1.msra.mxu0 %v1605
    %1641 = vmatprep.subr.mxu0 0.0
    %1642 = vmatpush1.msra.mxu0 %v1606
    %1643 = vmatprep.subr.mxu0 0.0
    %1644 = vmatpush1.msra.mxu0 %v1607
    %1645 = vmatprep.subr.mxu0 0.0
    %1646 = vmatpush1.msra.mxu0 %v1608
    %1647 = vmatprep.subr.mxu0 0.0
    %1648 = vmatpush1.msra.mxu0 %v1609
    %1649 = vmatprep.subr.mxu0 0.0
    %1650 = vmatpush1.msra.mxu0 %v1610
    %1651 = vmatprep.subr.mxu0 0.0
    %1652 = vmatpush1.msra.mxu0 %v1611
    %1653 = vmatprep.subr.mxu0 0.0
    %1654 = vmatpush1.msra.mxu0 %v1612
    %1655 = vmatprep.subr.mxu0 0.0
    %1656 = vmatpush1.msra.mxu0 0.0
    %1657 = vmatprep.subr.mxu0 0.0
    %1658 = vmatpush1.msra.mxu0 0.0
    %1659 = vmatprep.subr.mxu0 0.0
    %1660 = vmatpush1.msra.mxu0 0.0
    %1661 = vmatprep.subr.mxu0 0.0
    %1662 = vmatpush1.msra.mxu0 0.0
    %1663 = vmatprep.subr.mxu0 0.0
    %1664 = vmatpush1.msra.mxu0 0.0
    %1665 = vmatprep.subr.mxu0 0.0
    %1666 = vmatpush1.msra.mxu0 0.0
    %1667 = vmatprep.subr.mxu0 0.0
    %1668 = vmatpush1.msra.mxu0 0.0
    %1669 = vmatprep.subr.mxu0 0.0
    %1670 = vmatpush1.msra.mxu0 0.0
    %1671 = vmatprep.subr.mxu0 0.0
    %1672 = vmatpush1.msra.mxu0 0.0
    %1673 = vmatprep.subr.mxu0 0.0
    %1674 = vmatpush1.msra.mxu0 0.0
    %1675 = vmatprep.subr.mxu0 0.0
    %1676 = vmatpush1.msra.mxu0 0.0
    %1677 = vmatprep.subr.mxu0 0.0
    %1678 = vmatpush1.msra.mxu0 0.0
    %1679 = vmatprep.subr.mxu0 0.0
    %1680 = vmatpush1.msra.mxu0 0.0
    %1681 = vmatprep.subr.mxu0 0.0
    %1682 = vmatpush1.msra.mxu0 0.0
    %1683 = vmatprep.subr.mxu0 0.0
    %1684 = vmatpush1.msra.mxu0 0.0
    %1685 = vmatprep.subr.mxu0 0.0
    %1686 = vmatpush1.msra.mxu0 0.0
    %1687 = vmatprep.mubr.f32.mxu0 0.0
    %1688 = vmatmul.mubr.f32.gmra.mrb[0].mxu0 %v1621
    %v1689 = vpop.f32.mrb[0].mxu0
    %v1690 = vadd.f32 0.0, %v1689
    %v1691 = vpop.f32.mrb[0].mxu0
    %1692 = vdwg.mxu0
    %v1693 = vadd.f32 %v1622, %v1690
    %1694 = vst [vmem:[#allocation2] sm:$0xff] %v1693
    // Predicated region
    $region74: #{tpu_custom_call.1} parent=1 // pred_check
      %p1695 = pneg %p98
    $region75: #{tpu_custom_call.1} parent=1 // pred_check_branch
      %1697 = sbr.rel (%p1695) target = $region77
    $region76: #{tpu_custom_call.1} parent=1 // pred_region
      %v1698 = vld [vmem:[#allocation2] sm:$0xff]
      %v1699 = vld [vmem:[#allocation8] sm:$0xff]
      %v1700 = vld [vmem:[#allocation8 + $0x8] sm:$0xff]
      %v1701 = vld [vmem:[#allocation8 + $0x10] sm:$0xff]
      %v1702 = vld [vmem:[#allocation8 + $0x18] sm:$0xff]
      %v1703 = vld [vmem:[#allocation8 + $0x20] sm:$0xff]
      %v1704 = vld [vmem:[#allocation8 + $0x28] sm:$0xff]
      %v1705 = vld [vmem:[#allocation8 + $0x30] sm:$0xff]
      %v1706 = vld [vmem:[#allocation8 + $0x38] sm:$0xff]
      %v1707 = vld [vmem:[#allocation8 + $0x40] sm:$0xff]
      %v1708 = vld [vmem:[#allocation8 + $0x48] sm:$0xff]
      %v1709 = vld [vmem:[#allocation8 + $0x50] sm:$0xff]
      %v1710 = vld [vmem:[#allocation8 + $0x58] sm:$0xff]
      %v1711 = vld [vmem:[#allocation8 + $0x60] sm:$0xff]
      %v1712 = vld [vmem:[#allocation8 + $0x68] sm:$0xff]
      %v1713 = vld [vmem:[#allocation8 + $0x70] sm:$0xff]
      %v1714 = vld [vmem:[#allocation8 + $0x78] sm:$0xff]
      %v1715 = vld [vmem:[%s10] sm:$0x1]
      %v1717 = vlaneseq
      %v1718 = vshrl.u32 %v1717, 7
      %v1719 = vsub.s32 0, %v1718
      %v1720 = vrot.slane %v1715, %v1719
      %1722 = vmatprep.subr.mxu0 0.0
      %1723 = vmatpush1.msra.mxu0 %v1699
      %1724 = vmatprep.subr.mxu0 0.0
      %1725 = vmatpush1.msra.mxu0 %v1700
      %1726 = vmatprep.subr.mxu0 0.0
      %1727 = vmatpush1.msra.mxu0 %v1701
      %1728 = vmatprep.subr.mxu0 0.0
      %1729 = vmatpush1.msra.mxu0 %v1702
      %1730 = vmatprep.subr.mxu0 0.0
      %1731 = vmatpush1.msra.mxu0 %v1703
      %1732 = vmatprep.subr.mxu0 0.0
      %1733 = vmatpush1.msra.mxu0 %v1704
      %1734 = vmatprep.subr.mxu0 0.0
      %1735 = vmatpush1.msra.mxu0 %v1705
      %1736 = vmatprep.subr.mxu0 0.0
      %1737 = vmatpush1.msra.mxu0 %v1706
      %1738 = vmatprep.subr.mxu0 0.0
      %1739 = vmatpush1.msra.mxu0 %v1707
      %1740 = vmatprep.subr.mxu0 0.0
      %1741 = vmatpush1.msra.mxu0 %v1708
      %1742 = vmatprep.subr.mxu0 0.0
      %1743 = vmatpush1.msra.mxu0 %v1709
      %1744 = vmatprep.subr.mxu0 0.0
      %1745 = vmatpush1.msra.mxu0 %v1710
      %1746 = vmatprep.subr.mxu0 0.0
      %1747 = vmatpush1.msra.mxu0 %v1711
      %1748 = vmatprep.subr.mxu0 0.0
      %1749 = vmatpush1.msra.mxu0 %v1712
      %1750 = vmatprep.subr.mxu0 0.0
      %1751 = vmatpush1.msra.mxu0 %v1713
      %1752 = vmatprep.subr.mxu0 0.0
      %1753 = vmatpush1.msra.mxu0 %v1714
      %1754 = vmatprep.subr.mxu0 0.0
      %1755 = vmatpush1.msra.mxu0 0.0
      %1756 = vmatprep.subr.mxu0 0.0
      %1757 = vmatpush1.msra.mxu0 0.0
      %1758 = vmatprep.subr.mxu0 0.0
      %1759 = vmatpush1.msra.mxu0 0.0
      %1760 = vmatprep.subr.mxu0 0.0
      %1761 = vmatpush1.msra.mxu0 0.0
      %1762 = vmatprep.subr.mxu0 0.0
      %1763 = vmatpush1.msra.mxu0 0.0
      %1764 = vmatprep.subr.mxu0 0.0
      %1765 = vmatpush1.msra.mxu0 0.0
      %1766 = vmatprep.subr.mxu0 0.0
      %1767 = vmatpush1.msra.mxu0 0.0
      %1768 = vmatprep.subr.mxu0 0.0
      %1769 = vmatpush1.msra.mxu0 0.0
      %1770 = vmatprep.subr.mxu0 0.0
      %1771 = vmatpush1.msra.mxu0 0.0
      %1772 = vmatprep.subr.mxu0 0.0
      %1773 = vmatpush1.msra.mxu0 0.0
      %1774 = vmatprep.subr.mxu0 0.0
      %1775 = vmatpush1.msra.mxu0 0.0
      %1776 = vmatprep.subr.mxu0 0.0
      %1777 = vmatpush1.msra.mxu0 0.0
      %1778 = vmatprep.subr.mxu0 0.0
      %1779 = vmatpush1.msra.mxu0 0.0
      %1780 = vmatprep.subr.mxu0 0.0
      %1781 = vmatpush1.msra.mxu0 0.0
      %1782 = vmatprep.subr.mxu0 0.0
      %1783 = vmatpush1.msra.mxu0 0.0
      %1784 = vmatprep.subr.mxu0 0.0
      %1785 = vmatpush1.msra.mxu0 0.0
      %1786 = vmatprep.mubr.f32.mxu0 0.0
      %1787 = vmatmul.mubr.f32.gmra.mrb[0].mxu0 %v1698
      %v1788 = vpop.f32.mrb[0].mxu0
      %v1789 = vadd.f32 %v1720, %v1788
      %v1790 = vpop.f32.mrb[0].mxu0
      %1791 = vdwg.mxu0
      %vm1792 = vcmp.gt.f32.partialorder %v1789, 20.0
      %v1793 = vmin.f32 %v1789, 20.0
      %v1794 = vmul.f32 %v1793, 1.442695
      %v1795 = vpow.pop %v1794
      %v1796 = vadd.f32 %v1795, 1.0
      %v1797 = vlog2.pop %v1796
      %v1798 = vmul.f32 %v1797, 0.6931472
      %v1799 = vmul.f32 -0.5, %v1795
      %v1800 = vadd.f32 %v1799, 1.0
      %v1801 = vmul.f32 %v1800, %v1795
      %v1802 = vand.u32 2147483647, %v1795
      %vm1803 = vcmp.lt.f32.partialorder %v1802, 0.0004427343
      %v1804 = vsel %vm1803, %v1801, %v1798
      %v1805 = vsel %vm1792, %v1789, %v1804
      %v1806 = vsub.f32 %v1805, 0.6931472
      %v1807 = vld [vmem:[#allocation9] sm:$0xff]
      %v1808 = vld [vmem:[#allocation9 + $0x8] sm:$0xff]
      %v1809 = vld [vmem:[#allocation9 + $0x10] sm:$0xff]
      %v1810 = vld [vmem:[#allocation9 + $0x18] sm:$0xff]
      %v1811 = vld [vmem:[#allocation9 + $0x20] sm:$0xff]
      %v1812 = vld [vmem:[#allocation9 + $0x28] sm:$0xff]
      %v1813 = vld [vmem:[#allocation9 + $0x30] sm:$0xff]
      %v1814 = vld [vmem:[#allocation9 + $0x38] sm:$0xff]
      %v1815 = vld [vmem:[#allocation9 + $0x40] sm:$0xff]
      %v1816 = vld [vmem:[#allocation9 + $0x48] sm:$0xff]
      %v1817 = vld [vmem:[#allocation9 + $0x50] sm:$0xff]
      %v1818 = vld [vmem:[#allocation9 + $0x58] sm:$0xff]
      %v1819 = vld [vmem:[#allocation9 + $0x60] sm:$0xff]
      %v1820 = vld [vmem:[#allocation9 + $0x68] sm:$0xff]
      %v1821 = vld [vmem:[#allocation9 + $0x70] sm:$0xff]
      %v1822 = vld [vmem:[#allocation9 + $0x78] sm:$0xff]
      %v1823 = vld [vmem:[%s12] sm:$0x1]
      %v1825 = vlaneseq
      %v1826 = vshrl.u32 %v1825, 7
      %v1827 = vsub.s32 0, %v1826
      %v1828 = vrot.slane %v1823, %v1827
      %1830 = vmatprep.subr.mxu0 0.0
      %1831 = vmatpush1.msra.mxu0 %v1807
      %1832 = vmatprep.subr.mxu0 0.0
      %1833 = vmatpush1.msra.mxu0 %v1808
      %1834 = vmatprep.subr.mxu0 0.0
      %1835 = vmatpush1.msra.mxu0 %v1809
      %1836 = vmatprep.subr.mxu0 0.0
      %1837 = vmatpush1.msra.mxu0 %v1810
      %1838 = vmatprep.subr.mxu0 0.0
      %1839 = vmatpush1.msra.mxu0 %v1811
      %1840 = vmatprep.subr.mxu0 0.0
      %1841 = vmatpush1.msra.mxu0 %v1812
      %1842 = vmatprep.subr.mxu0 0.0
      %1843 = vmatpush1.msra.mxu0 %v1813
      %1844 = vmatprep.subr.mxu0 0.0
      %1845 = vmatpush1.msra.mxu0 %v1814
      %1846 = vmatprep.subr.mxu0 0.0
      %1847 = vmatpush1.msra.mxu0 %v1815
      %1848 = vmatprep.subr.mxu0 0.0
      %1849 = vmatpush1.msra.mxu0 %v1816
      %1850 = vmatprep.subr.mxu0 0.0
      %1851 = vmatpush1.msra.mxu0 %v1817
      %1852 = vmatprep.subr.mxu0 0.0
      %1853 = vmatpush1.msra.mxu0 %v1818
      %1854 = vmatprep.subr.mxu0 0.0
      %1855 = vmatpush1.msra.mxu0 %v1819
      %1856 = vmatprep.subr.mxu0 0.0
      %1857 = vmatpush1.msra.mxu0 %v1820
      %1858 = vmatprep.subr.mxu0 0.0
      %1859 = vmatpush1.msra.mxu0 %v1821
      %1860 = vmatprep.subr.mxu0 0.0
      %1861 = vmatpush1.msra.mxu0 %v1822
      %1862 = vmatprep.subr.mxu0 0.0
      %1863 = vmatpush1.msra.mxu0 0.0
      %1864 = vmatprep.subr.mxu0 0.0
      %1865 = vmatpush1.msra.mxu0 0.0
      %1866 = vmatprep.subr.mxu0 0.0
      %1867 = vmatpush1.msra.mxu0 0.0
      %1868 = vmatprep.subr.mxu0 0.0
      %1869 = vmatpush1.msra.mxu0 0.0
      %1870 = vmatprep.subr.mxu0 0.0
      %1871 = vmatpush1.msra.mxu0 0.0
      %1872 = vmatprep.subr.mxu0 0.0
      %1873 = vmatpush1.msra.mxu0 0.0
      %1874 = vmatprep.subr.mxu0 0.0
      %1875 = vmatpush1.msra.mxu0 0.0
      %1876 = vmatprep.subr.mxu0 0.0
      %1877 = vmatpush1.msra.mxu0 0.0
      %1878 = vmatprep.subr.mxu0 0.0
      %1879 = vmatpush1.msra.mxu0 0.0
      %1880 = vmatprep.subr.mxu0 0.0
      %1881 = vmatpush1.msra.mxu0 0.0
      %1882 = vmatprep.subr.mxu0 0.0
      %1883 = vmatpush1.msra.mxu0 0.0
      %1884 = vmatprep.subr.mxu0 0.0
      %1885 = vmatpush1.msra.mxu0 0.0
      %1886 = vmatprep.subr.mxu0 0.0
      %1887 = vmatpush1.msra.mxu0 0.0
      %1888 = vmatprep.subr.mxu0 0.0
      %1889 = vmatpush1.msra.mxu0 0.0
      %1890 = vmatprep.subr.mxu0 0.0
      %1891 = vmatpush1.msra.mxu0 0.0
      %1892 = vmatprep.subr.mxu0 0.0
      %1893 = vmatpush1.msra.mxu0 0.0
      %1894 = vmatprep.mubr.f32.mxu0 0.0
      %1895 = vmatmul.mubr.f32.gmra.mrb[0].mxu0 %v1806
      %v1896 = vpop.f32.mrb[0].mxu0
      %v1897 = vadd.f32 %v1828, %v1896
      %v1898 = vpop.f32.mrb[0].mxu0
      %1899 = vdwg.mxu0
      %v1900 = vld [vmem:[#allocation3] sm:$0xff]
      %v1901 = vadd.f32 %v1900, %v1897
      %1902 = vst [vmem:[#allocation11] sm:$0xff] %v1901
    $region77: #{tpu_custom_call.1} parent=1 // pred_fallthru
      _
    // Predicated region
    $region78: #{tpu_custom_call.1} parent=1 // pred_check
      _
    $region79: #{tpu_custom_call.1} parent=1 // pred_check_branch
      %1904 = sbr.rel (0) target = $region81
    $region80: #{tpu_custom_call.1} parent=1 // pred_region
      %s1906 = ssub.s32 128, 128
      %1907 = vsyncadd [#allocation5], %s1906
      %s1909 = sshll.u32 [#allocation11], 4
      %s1910 = int_to_ptr.vmem [resolvable:$true] %s1909
      %1912 = dma.vmem_to_hbm [thread:$0]  %s1910, 128, %s13, [#allocation5]
    $region81: #{tpu_custom_call.1} parent=1 // pred_fallthru
      _
    // Predicated region
    $region82: #{tpu_custom_call.1} parent=1 // pred_check
      _
    $region83: #{tpu_custom_call.1} parent=1 // pred_check_branch
      %1914 = sbr.rel (0) target = $region85
    $region84: #{tpu_custom_call.1} parent=1 // pred_region
      %1915 = dma.done [#allocation5], 128
    $region85: #{tpu_custom_call.1} parent=1 // pred_fallthru
      _
    %1916 = vsyncpa [#allocation4], 1
    %1917 = vsyncpa [#allocation7], 1
    %1918 = vsyncpa [#allocation10], 1
    %1919 = vsyncpa [#allocation5], 1

</llo_original>
